<compile_context>
chip_gen: v6e
topology: v6e:2x2x1
jax: 0.10.0
libtpu: 0.0.40
codegen_flags: <defaults>
</compile_context>

<pallas_src>
import functools

import numpy as np
import jax
import jax.numpy as jnp
from jax.experimental import pallas as pl
from jax.experimental.pallas import tpu as pltpu


# ----------------------------------------------------------------------------- #
# Fused Fourier-layer Pallas kernel
# ----------------------------------------------------------------------------- #
def _fourier_layer_kernel(x_ref, fb_ref, bb_ref, wa_ref, wb_ref, wpw_ref, bias_ref,
                          o_ref, *, apply_relu):
    """One grid step = one batch tile.

    x_ref   : (Bt, Cin, N)   input signal tile
    fb_ref  : (N, 2P)        packed forward DFT basis [cos | -sin | -sin | cos]
    bb_ref  : (P, N)         packed inverse DFT basis [coef*cos ; -coef*sin]
    wa_ref  : (Cout, Cin, P) packed spectral weights  [Wr | Wr]
    wb_ref  : (Cout, Cin, P) packed spectral weights  [-Wi | Wi]
    wpw_ref : (Cout, Cin)    1x1 conv weight
    bias_ref: (Cout, 1)      1x1 conv bias
    o_ref   : (Bt, Cout, N)  output tile
    """
    bt, cin, n = x_ref.shape
    cout, _, p = wa_ref.shape

    x3 = x_ref[...]                                   # (Bt, Cin, N)
    x2 = x3.reshape(bt * cin, n)                      # Cin multiple of 8 -> layout no-op

    # (1) Truncated rFFT + swapped copy from ONE lane-dense GEMM.
    #     Columns [0:P)  -> packed spectrum  [Re | Im]
    #     Columns [P:2P) -> swapped spectrum [Im | Re]
    #     Both slices sit on 128-lane boundaries -> no cross-lane movement.
    xf_all = jnp.dot(x2, fb_ref[...], preferred_element_type=jnp.float32)   # (Bt*Cin, 2P)
    xf = xf_all[:, :p].reshape(bt, cin, p)
    xfs = xf_all[:, p:].reshape(bt, cin, p)

    # (2) Complex per-mode channel mixing: tiny VPU contraction over Cin.
    #     YF[b,o,:] = sum_i XF[b,i,:]*WA[o,i,:] + swap(XF)[b,i,:]*WB[o,i,:]
    wa = wa_ref[...]                                  # hoisted once (no per-iter reloads)
    wb = wb_ref[...]
    yf = jnp.sum(xf[:, None, :, :] * wa[None, :, :, :]
                 + xfs[:, None, :, :] * wb[None, :, :, :], axis=2)          # (Bt, Cout, P)

    # (3) Inverse transform: single GEMM with N on the lane dim (unmasked stores).
    spec = jnp.dot(yf.reshape(bt * cout, p), bb_ref[...],
                   preferred_element_type=jnp.float32).reshape(bt, cout, n)

    # (4) Fused 1x1 conv + bias + residual (+ ReLU).  Bt is a small static
    #     constant -> short static loop of MXU matmuls, bounded live ranges.
    wpw = wpw_ref[...]                                # (Cout, Cin)
    bias = bias_ref[...]                              # (Cout, 1)
    for b in range(bt):
        y_b = spec[b] + jnp.dot(wpw, x3[b], preferred_element_type=jnp.float32) + bias
        if apply_relu:
            y_b = jnp.maximum(y_b, 0.0)
        o_ref[b] = y_b.astype(o_ref.dtype)


def _round_up(x, m):
    return ((x + m - 1) // m) * m


def _build_dft_bases(n, modes, half):
    """Packed truncated forward / inverse real-DFT bases (zero-padded, lane-dense).

    Forward basis FB has width 2P:
        [0:P)   -> [cos | -sin]   (packed spectrum [Re | Im])
        [P:2P)  -> [-sin | cos]   (swapped spectrum [Im | Re])
    so a single GEMM gives both the spectrum and its swapped copy.
    """
    nn = np.arange(n, dtype=np.float64)
    kk = np.arange(modes, dtype=np.float64)
    ang = 2.0 * np.pi * np.outer(nn, kk) / n                     # (n, modes)
    cos = np.cos(ang)
    msin = -np.sin(ang)
    p = 2 * half

    fb = np.zeros((n, 2 * p), dtype=np.float32)
    fb[:, :modes] = cos
    fb[:, half:half + modes] = msin
    fb[:, p:p + modes] = msin
    fb[:, p + half:p + half + modes] = cos

    # irfft one-sided semantics: DC (and Nyquist, if present) imaginary parts dropped.
    coef = np.full((modes,), 2.0 / n, dtype=np.float64)
    coef[0] = 1.0 / n
    imag_used = np.ones((modes,), dtype=np.float64)
    imag_used[0] = 0.0
    if n % 2 == 0 and modes == n // 2 + 1:
        coef[-1] = 1.0 / n
        imag_used[-1] = 0.0

    bb = np.zeros((p, n), dtype=np.float32)
    bb[:modes, :] = coef[:, None] * cos.T
    bb[half:half + modes, :] = (coef * imag_used)[:, None] * msin.T
    return jnp.asarray(fb), jnp.asarray(bb)


def _pack_spectral_weights(weights_complex, half):
    """(Cin, Cout, M) complex -> WA = [Wr|Wr], WB = [-Wi|Wi], each (Cout, Cin, 2*half)."""
    wr = jnp.transpose(jnp.real(weights_complex), (1, 0, 2)).astype(jnp.float32)
    wi = jnp.transpose(jnp.imag(weights_complex), (1, 0, 2)).astype(jnp.float32)
    cout, cin, m = wr.shape
    wa = jnp.zeros((cout, cin, 2 * half), jnp.float32)
    wb = jnp.zeros((cout, cin, 2 * half), jnp.float32)
    wa = wa.at[:, :, :m].set(wr).at[:, :, half:half + m].set(wr)
    wb = wb.at[:, :, :m].set(-wi).at[:, :, half:half + m].set(wi)
    return wa, wb


def _pick_block_b(b, cin, cout, n):
    """Largest batch tile keeping GEMM rows in the hundreds and the double-buffered
    x/out tiles far below the v7x scoped-VMEM budget."""
    best = 1
    for d in range(1, b + 1):
        if b % d:
            continue
        rows = d * max(cin, cout)
        tile_bytes = 2 * 2 * d * (cin + cout) * n * 4
        if rows <= 1024 and tile_bytes <= 8 * 1024 * 1024:
            best = d
    return best


def fourier_layer(x, weights_complex, w_pw, b_pw, modes, *, apply_relu, block_b=None):
    """Fused FNO1d Fourier layer: [relu](SpectralConv1d(x) + w_pw @ x + b_pw).

    x: (B, Cin, N) f32, weights_complex: (Cin, Cout, modes) complex64,
    w_pw: (Cout, Cin) f32, b_pw: (Cout,) f32.  Returns (B, Cout, N) f32.
    """
    b, cin, n = x.shape
    cout = weights_complex.shape[1]
    assert modes <= n // 2 + 1
    assert n % 128 == 0, "spatial size must be lane-aligned (multiple of 128)"
    assert cin % 8 == 0 and cout % 8 == 0, "channel counts must be sublane-aligned (8)"

    half = _round_up(modes, 64)        # each packed half; P = 2*half is a multiple of 128
    p = 2 * half

    fb, bb = _build_dft_bases(n, modes, half)          # fb: (n, 2p), bb: (p, n)
    wa, wb = _pack_spectral_weights(weights_complex, half)
    wpw = w_pw.astype(jnp.float32)
    bias = b_pw.astype(jnp.float32).reshape(cout, 1)

    if block_b is None:
        block_b = _pick_block_b(b, cin, cout, n)
    assert b % block_b == 0

    kernel = functools.partial(_fourier_layer_kernel, apply_relu=apply_relu)

    return pl.pallas_call(
        kernel,
        out_shape=jax.ShapeDtypeStruct((b, cout, n), x.dtype),
        grid_spec=pltpu.PrefetchScalarGridSpec(
            num_scalar_prefetch=0,
            grid=(b // block_b,),
            in_specs=[
                pl.BlockSpec((block_b, cin, n), lambda i: (i, 0, 0)),   # x, batch-tiled
                pl.BlockSpec((n, 2 * p), lambda i: (0, 0)),             # forward basis (grid-invariant)
                pl.BlockSpec((p, n), lambda i: (0, 0)),                 # inverse basis (grid-invariant)
                pl.BlockSpec((cout, cin, p), lambda i: (0, 0, 0)),      # WA
                pl.BlockSpec((cout, cin, p), lambda i: (0, 0, 0)),      # WB
                pl.BlockSpec((cout, cin), lambda i: (0, 0)),            # 1x1 conv weight
                pl.BlockSpec((cout, 1), lambda i: (0, 0)),              # 1x1 conv bias
            ],
            out_specs=pl.BlockSpec((block_b, cout, n), lambda i: (i, 0, 0)),
        ),
        compiler_params=pltpu.CompilerParams(
            dimension_semantics=("parallel",),          # batch axis -> v7x megacore sharding
            vmem_limit_bytes=32 * 1024 * 1024,
        ),
    )(x, fb, bb, wa, wb, wpw, bias)


# ----------------------------------------------------------------------------- #
# Plain-JAX glue: DeepONet lift, fc0/fc1/fc2, parameter init, reference layer
# ----------------------------------------------------------------------------- #
def _init_linear(key, fan_in, fan_out):
    kw, kb = jax.random.split(key)
    bound = 1.0 / np.sqrt(fan_in)
    w = jax.random.uniform(kw, (fan_out, fan_in), jnp.float32, -bound, bound)
    bvec = jax.random.uniform(kb, (fan_out,), jnp.float32, -bound, bound)
    return w, bvec


def _init_mlp(key, layers):
    keys = jax.random.split(key, len(layers) - 1)
    return [_init_linear(k, layers[i], layers[i + 1]) for i, k in enumerate(keys)]


def _mlp(params, x):
    for w, bvec in params[:-1]:
        x = jax.nn.relu(x @ w.T + bvec)
    w, bvec = params[-1]
    return x @ w.T + bvec


def deeponet_forward(params, x):
    # x: (B, S, 4) with S = 128 (fixed by the DeepONet layer sizes [256,...]).
    b1 = jnp.concatenate([x[..., 0], x[..., 1]], axis=1)     # (B, 2S)
    b2 = x[..., 2]                                           # (B, S)
    t = x[0, :, 3][:, None]                                  # (S, 1)
    b1 = _mlp(params["branch1"], b1)
    b2 = _mlp(params["branch2"], b2)
    t = _mlp(params["trunk"], t)                             # (S, 128)
    branch = b1 * b2                                         # (B, 128)
    return branch @ t.T                                      # (B, S)


def init_fno1d_params(key, modes, width):
    keys = jax.random.split(key, 16)
    don = {
        "branch1": _init_mlp(keys[0], [256, 128, 128, 128, 128]),
        "branch2": _init_mlp(keys[1], [128, 128, 128, 128, 128]),
        "trunk":   _init_mlp(keys[2], [1, 128, 128, 128, 128]),
    }
    fc0 = _init_linear(keys[3], 1, width)
    fc1 = _init_linear(keys[4], width, 128)
    fc2 = _init_linear(keys[5], 128, 1)
    scale = 1.0 / (width * width)
    convs = []
    for i in range(4):
        kr, ki = jax.random.split(keys[6 + i])
        wr = scale * jax.random.uniform(kr, (width, width, modes), jnp.float32)
        wi = scale * jax.random.uniform(ki, (width, width, modes), jnp.float32)
        convs.append((wr + 1j * wi).astype(jnp.complex64))
    ws = [_init_linear(keys[10 + i], width, width) for i in range(4)]   # 1x1 convs
    return {"don": don, "fc0": fc0, "fc1": fc1, "fc2": fc2, "conv": convs, "w": ws}


def fourier_layer_reference(x, weights_complex, w_pw, b_pw, modes, *, apply_relu):
    """Pure-JAX Fourier layer mirroring the torch forward (rfft/irfft)."""
    b, cin, n = x.shape
    cout = weights_complex.shape[1]
    x_ft = jnp.fft.rfft(x)
    prod = jnp.einsum("bix,iox->box", x_ft[:, :, :modes], weights_complex)
    out_ft = jnp.zeros((b, cout, n // 2 + 1), jnp.complex64).at[:, :, :modes].set(prod)
    spec = jnp.fft.irfft(out_ft, n=n)
    pw = jnp.einsum("oi,bin->bon", w_pw, x) + b_pw[None, :, None]
    y = spec + pw
    return jax.nn.relu(y) if apply_relu else y


def fno1d_forward(params, x, modes, *, use_pallas=True):
    """Full FNO1d.forward: DeepONet lift -> fc0 -> 4x Fourier layers -> fc1 -> fc2."""
    xd = deeponet_forward(params["don"], x)            # (B, S)
    h = xd[..., None]                                  # (B, S, 1)
    w0, b0 = params["fc0"]
    h = h @ w0.T + b0                                  # (B, S, width)
    h = jnp.transpose(h, (0, 2, 1))                    # (B, width, S)
    for li in range(4):
        wc = params["conv"][li]
        wpw, bpw = params["w"][li]
        relu = li < 3                                  # last Fourier layer has no ReLU
        if use_pallas:
            h = fourier_layer(h, wc, wpw, bpw, modes, apply_relu=relu)
        else:
            h = fourier_layer_reference(h, wc, wpw, bpw, modes, apply_relu=relu)
    h = jnp.transpose(h, (0, 2, 1))                    # (B, S, width)
    w1, b1 = params["fc1"]
    h = jax.nn.relu(h @ w1.T + b1)
    w2, b2 = params["fc2"]
    return h @ w2.T + b2                               # (B, S, 1)


# ----------------------------------------------------------------------------- #
# Self-test
# ----------------------------------------------------------------------------- #
if __name__ == "__main__":
    MODES, WIDTH, S, B = 16, 16, 128, 4    # S = 128 is fixed by the DeepONet layer sizes

    key = jax.random.PRNGKey(0)
    kp, kx = jax.random.split(key)
    params = init_fno1d_params(kp, MODES, WIDTH)
    x_in = jax.random.normal(kx, (B, S, 4), dtype=jnp.float32)

    # Direct check of the fused Fourier-layer kernel (block_b=2 -> grid of 2 steps).
    kh = jax.random.fold_in(kx, 1)
    h = jax.random.normal(kh, (B, WIDTH, S), dtype=jnp.float32)
    got = jax.block_until_ready(
        fourier_layer(h, params["conv"][0], *params["w"][0], MODES,
                      apply_relu=True, block_b=2))
    want = jax.block_until_ready(
        fourier_layer_reference(h, params["conv"][0], *params["w"][0], MODES,
                                apply_relu=True))
    np.testing.assert_allclose(np.asarray(got), np.asarray(want), rtol=2e-2, atol=2e-3)

    # Full FNO1d forward with Pallas Fourier layers vs. pure-JAX (fft) reference.
    out = jax.block_until_ready(fno1d_forward(params, x_in, MODES, use_pallas=True))
    ref = jax.block_until_ready(fno1d_forward(params, x_in, MODES, use_pallas=False))
    np.testing.assert_allclose(np.asarray(out), np.asarray(ref), rtol=2e-2, atol=2e-3)

    print("KERNEL_OK")
</pallas_src>

<mosaic_0001>
module attributes {stable_mosaic.version = 11 : i64} {
  func.func @_fourier_layer_kernel(%arg0: i32, %arg1: memref<2x16x128xf32, #tpu.memory_space<vmem>>, %arg2: memref<128x256xf32, #tpu.memory_space<vmem>>, %arg3: memref<128x128xf32, #tpu.memory_space<vmem>>, %arg4: memref<16x16x128xf32, #tpu.memory_space<vmem>>, %arg5: memref<16x16x128xf32, #tpu.memory_space<vmem>>, %arg6: memref<16x16xf32, #tpu.memory_space<vmem>>, %arg7: memref<16x1xf32, #tpu.memory_space<vmem>>, %arg8: memref<2x16x128xf32, #tpu.memory_space<vmem>>) attributes {dimension_semantics = [#tpu.dimension_semantics<parallel>], iteration_bounds = array<i64: 2>, scalar_prefetch = 0 : i64, scratch_operands = 0 : i64, tpu.core_type = #tpu.core_type<tc>, window_params = [{transform_indices = @transform_0, window_bounds = array<i64: 2, 16, 128>}, {pipeline_mode = #tpu.pipeline_mode<synchronous>, transform_indices = @transform_1, window_bounds = array<i64: 128, 256>}, {pipeline_mode = #tpu.pipeline_mode<synchronous>, transform_indices = @transform_2, window_bounds = array<i64: 128, 128>}, {pipeline_mode = #tpu.pipeline_mode<synchronous>, transform_indices = @transform_3, window_bounds = array<i64: 16, 16, 128>}, {pipeline_mode = #tpu.pipeline_mode<synchronous>, transform_indices = @transform_4, window_bounds = array<i64: 16, 16, 128>}, {pipeline_mode = #tpu.pipeline_mode<synchronous>, transform_indices = @transform_5, window_bounds = array<i64: 16, 16>}, {pipeline_mode = #tpu.pipeline_mode<synchronous>, transform_indices = @transform_6, window_bounds = array<i64: 16, 1>}, {transform_indices = @transform_7, window_bounds = array<i64: 2, 16, 128>}]} {
    %c0 = arith.constant 0 : index
    %c0_0 = arith.constant 0 : index
    %c0_1 = arith.constant 0 : index
    %0 = vector.load %arg1[%c0, %c0_0, %c0_1] : memref<2x16x128xf32, #tpu.memory_space<vmem>>, vector<2x16x128xf32>
    %1 = vector.shape_cast %0 : vector<2x16x128xf32> to vector<32x128xf32>
    %c0_2 = arith.constant 0 : index
    %c0_3 = arith.constant 0 : index
    %2 = vector.load %arg2[%c0_2, %c0_3] : memref<128x256xf32, #tpu.memory_space<vmem>>, vector<128x256xf32>
    %cst = arith.constant dense<0.000000e+00> : vector<32x256xf32>
    %3 = tpu.matmul %1, %2, %cst {dimension_numbers = #tpu.dot_dimension_numbers<[1], [0], [0], [1], [0, 0, 1, 1], [], []>} : vector<32x128xf32>, vector<128x256xf32>, vector<32x256xf32> -> vector<32x256xf32>
    %4 = vector.extract_strided_slice %3 {offsets = [0, 0], sizes = [32, 128], strides = [1, 1]} : vector<32x256xf32> to vector<32x128xf32>
    %5 = vector.shape_cast %4 : vector<32x128xf32> to vector<2x16x128xf32>
    %6 = vector.extract_strided_slice %3 {offsets = [0, 128], sizes = [32, 128], strides = [1, 1]} : vector<32x256xf32> to vector<32x128xf32>
    %7 = vector.shape_cast %6 : vector<32x128xf32> to vector<2x16x128xf32>
    %c0_4 = arith.constant 0 : index
    %c0_5 = arith.constant 0 : index
    %c0_6 = arith.constant 0 : index
    %8 = vector.load %arg4[%c0_4, %c0_5, %c0_6] : memref<16x16x128xf32, #tpu.memory_space<vmem>>, vector<16x16x128xf32>
    %c0_7 = arith.constant 0 : index
    %c0_8 = arith.constant 0 : index
    %c0_9 = arith.constant 0 : index
    %9 = vector.load %arg5[%c0_7, %c0_8, %c0_9] : memref<16x16x128xf32, #tpu.memory_space<vmem>>, vector<16x16x128xf32>
    %10 = vector.shape_cast %5 : vector<2x16x128xf32> to vector<2x1x16x128xf32>
    %11 = vector.shape_cast %8 : vector<16x16x128xf32> to vector<1x16x16x128xf32>
    %12 = vector.broadcast %10 : vector<2x1x16x128xf32> to vector<2x16x16x128xf32>
    %13 = vector.broadcast %11 : vector<1x16x16x128xf32> to vector<2x16x16x128xf32>
    %14 = arith.mulf %12, %13 : vector<2x16x16x128xf32>
    %15 = vector.shape_cast %7 : vector<2x16x128xf32> to vector<2x1x16x128xf32>
    %16 = vector.shape_cast %9 : vector<16x16x128xf32> to vector<1x16x16x128xf32>
    %17 = vector.broadcast %15 : vector<2x1x16x128xf32> to vector<2x16x16x128xf32>
    %18 = vector.broadcast %16 : vector<1x16x16x128xf32> to vector<2x16x16x128xf32>
    %19 = arith.mulf %17, %18 : vector<2x16x16x128xf32>
    %20 = arith.addf %14, %19 : vector<2x16x16x128xf32>
    %cst_10 = arith.constant dense<0.000000e+00> : vector<2x16x128xf32>
    %21 = vector.multi_reduction <add>, %20, %cst_10 [2] : vector<2x16x16x128xf32> to vector<2x16x128xf32>
    %22 = vector.shape_cast %21 : vector<2x16x128xf32> to vector<32x128xf32>
    %c0_11 = arith.constant 0 : index
    %c0_12 = arith.constant 0 : index
    %23 = vector.load %arg3[%c0_11, %c0_12] : memref<128x128xf32, #tpu.memory_space<vmem>>, vector<128x128xf32>
    %cst_13 = arith.constant dense<0.000000e+00> : vector<32x128xf32>
    %24 = tpu.matmul %22, %23, %cst_13 {dimension_numbers = #tpu.dot_dimension_numbers<[1], [0], [0], [1], [0, 0, 1, 1], [], []>} : vector<32x128xf32>, vector<128x128xf32>, vector<32x128xf32> -> vector<32x128xf32>
    %25 = vector.shape_cast %24 : vector<32x128xf32> to vector<2x16x128xf32>
    %c0_14 = arith.constant 0 : index
    %c0_15 = arith.constant 0 : index
    %26 = vector.load %arg6[%c0_14, %c0_15] : memref<16x16xf32, #tpu.memory_space<vmem>>, vector<16x16xf32>
    %c0_16 = arith.constant 0 : index
    %c0_17 = arith.constant 0 : index
    %27 = vector.load %arg7[%c0_16, %c0_17] : memref<16x1xf32, #tpu.memory_space<vmem>>, vector<16x1xf32>
    %28 = vector.extract_strided_slice %25 {offsets = [0, 0, 0], sizes = [1, 16, 128], strides = [1, 1, 1]} : vector<2x16x128xf32> to vector<1x16x128xf32>
    %29 = vector.shape_cast %28 : vector<1x16x128xf32> to vector<16x128xf32>
    %30 = vector.extract_strided_slice %0 {offsets = [0, 0, 0], sizes = [1, 16, 128], strides = [1, 1, 1]} : vector<2x16x128xf32> to vector<1x16x128xf32>
    %31 = vector.shape_cast %30 : vector<1x16x128xf32> to vector<16x128xf32>
    %cst_18 = arith.constant dense<0.000000e+00> : vector<16x128xf32>
    %32 = tpu.matmul %26, %31, %cst_18 {dimension_numbers = #tpu.dot_dimension_numbers<[1], [0], [0], [1], [0, 0, 1, 1], [], []>} : vector<16x16xf32>, vector<16x128xf32>, vector<16x128xf32> -> vector<16x128xf32>
    %33 = arith.addf %29, %32 : vector<16x128xf32>
    %34 = vector.broadcast %27 : vector<16x1xf32> to vector<16x128xf32>
    %35 = arith.addf %33, %34 : vector<16x128xf32>
    %cst_19 = arith.constant 0.000000e+00 : f32
    %36 = vector.broadcast %cst_19 : f32 to vector<16x128xf32>
    %37 = arith.maximumf %35, %36 : vector<16x128xf32>
    %c0_20 = arith.constant 0 : index
    %c0_21 = arith.constant 0 : index
    %c0_22 = arith.constant 0 : index
    %38 = vector.load %arg8[%c0_20, %c0_21, %c0_22] : memref<2x16x128xf32, #tpu.memory_space<vmem>>, vector<1x16x128xf32>
    %39 = vector.shape_cast %38 : vector<1x16x128xf32> to vector<16x128xf32>
    %40 = vector.shape_cast %37 : vector<16x128xf32> to vector<1x16x128xf32>
    tpu.vector_store %arg8[%c0_20, %c0_21, %c0_22], %40 {strides = array<i32>} : memref<2x16x128xf32, #tpu.memory_space<vmem>>, vector<1x16x128xf32>,
    %41 = vector.extract_strided_slice %25 {offsets = [1, 0, 0], sizes = [1, 16, 128], strides = [1, 1, 1]} : vector<2x16x128xf32> to vector<1x16x128xf32>
    %42 = vector.shape_cast %41 : vector<1x16x128xf32> to vector<16x128xf32>
    %43 = vector.extract_strided_slice %0 {offsets = [1, 0, 0], sizes = [1, 16, 128], strides = [1, 1, 1]} : vector<2x16x128xf32> to vector<1x16x128xf32>
    %44 = vector.shape_cast %43 : vector<1x16x128xf32> to vector<16x128xf32>
    %cst_23 = arith.constant dense<0.000000e+00> : vector<16x128xf32>
    %45 = tpu.matmul %26, %44, %cst_23 {dimension_numbers = #tpu.dot_dimension_numbers<[1], [0], [0], [1], [0, 0, 1, 1], [], []>} : vector<16x16xf32>, vector<16x128xf32>, vector<16x128xf32> -> vector<16x128xf32>
    %46 = arith.addf %42, %45 : vector<16x128xf32>
    %47 = vector.broadcast %27 : vector<16x1xf32> to vector<16x128xf32>
    %48 = arith.addf %46, %47 : vector<16x128xf32>
    %cst_24 = arith.constant 0.000000e+00 : f32
    %49 = vector.broadcast %cst_24 : f32 to vector<16x128xf32>
    %50 = arith.maximumf %48, %49 : vector<16x128xf32>
    %c1 = arith.constant 1 : index
    %c0_25 = arith.constant 0 : index
    %c0_26 = arith.constant 0 : index
    %51 = vector.load %arg8[%c1, %c0_25, %c0_26] : memref<2x16x128xf32, #tpu.memory_space<vmem>>, vector<1x16x128xf32>
    %52 = vector.shape_cast %51 : vector<1x16x128xf32> to vector<16x128xf32>
    %53 = vector.shape_cast %50 : vector<16x128xf32> to vector<1x16x128xf32>
    tpu.vector_store %arg8[%c1, %c0_25, %c0_26], %53 {strides = array<i32>} : memref<2x16x128xf32, #tpu.memory_space<vmem>>, vector<1x16x128xf32>,
    return
  }
  func.func @transform_0(%arg0: i32) -> (i32, i32, i32) {
    %c0_i32 = arith.constant 0 : i32
    %c0_i32_0 = arith.constant 0 : i32
    %c0_i32_1 = arith.constant 0 : i32
    return %arg0, %c0_i32, %c0_i32_0 : i32, i32, i32
  }
  func.func @transform_1(%arg0: i32) -> (i32, i32) {
    %c0_i32 = arith.constant 0 : i32
    %c0_i32_0 = arith.constant 0 : i32
    %c0_i32_1 = arith.constant 0 : i32
    return %c0_i32, %c0_i32_0 : i32, i32
  }
  func.func @transform_2(%arg0: i32) -> (i32, i32) {
    %c0_i32 = arith.constant 0 : i32
    %c0_i32_0 = arith.constant 0 : i32
    %c0_i32_1 = arith.constant 0 : i32
    return %c0_i32, %c0_i32_0 : i32, i32
  }
  func.func @transform_3(%arg0: i32) -> (i32, i32, i32) {
    %c0_i32 = arith.constant 0 : i32
    %c0_i32_0 = arith.constant 0 : i32
    %c0_i32_1 = arith.constant 0 : i32
    %c0_i32_2 = arith.constant 0 : i32
    return %c0_i32, %c0_i32_0, %c0_i32_1 : i32, i32, i32
  }
  func.func @transform_4(%arg0: i32) -> (i32, i32, i32) {
    %c0_i32 = arith.constant 0 : i32
    %c0_i32_0 = arith.constant 0 : i32
    %c0_i32_1 = arith.constant 0 : i32
    %c0_i32_2 = arith.constant 0 : i32
    return %c0_i32, %c0_i32_0, %c0_i32_1 : i32, i32, i32
  }
  func.func @transform_5(%arg0: i32) -> (i32, i32) {
    %c0_i32 = arith.constant 0 : i32
    %c0_i32_0 = arith.constant 0 : i32
    %c0_i32_1 = arith.constant 0 : i32
    return %c0_i32, %c0_i32_0 : i32, i32
  }
  func.func @transform_6(%arg0: i32) -> (i32, i32) {
    %c0_i32 = arith.constant 0 : i32
    %c0_i32_0 = arith.constant 0 : i32
    %c0_i32_1 = arith.constant 0 : i32
    return %c0_i32, %c0_i32_0 : i32, i32
  }
  func.func @transform_7(%arg0: i32) -> (i32, i32, i32) {
    %c0_i32 = arith.constant 0 : i32
    %c0_i32_0 = arith.constant 0 : i32
    %c0_i32_1 = arith.constant 0 : i32
    return %arg0, %c0_i32, %c0_i32_0 : i32, i32, i32
  }
}

</mosaic_0001>

<llo_original>
// kernel: tpu_custom_call.1
$region0: #{tpu_custom_call.1}
  #allocation0 [shape = 'u32[]', space=smem, size = 0x4, offset = 0x4, fixed_abs, tag = 'smem constant byte address 0x4 - core index']
  #allocation1 [shape = 'u32[144,128]{1,0:T(1,128)}', space=vmem, size = 0x12000, scoped, tag = 'internal scratch']
  %s0 = inlined_call_operand.hbm [shape: f32[4,16,128], index: 0, kind: input, shape index: {}]
  %s1 = inlined_call_operand.hbm [shape: f32[128,256], index: 1, kind: input, shape index: {}]
  %s2 = inlined_call_operand.hbm [shape: f32[128,128], index: 2, kind: input, shape index: {}]
  %s3 = inlined_call_operand.hbm [shape: f32[16,16,128], index: 3, kind: input, shape index: {}]
  %s4 = inlined_call_operand.hbm [shape: f32[16,16,128], index: 4, kind: input, shape index: {}]
  %s5 = inlined_call_operand.vmem [shape: f32[16,16], index: 5, kind: input, shape index: {}]
  %s6 = inlined_call_operand.vmem [shape: f32[16,1], index: 6, kind: input, shape index: {}]
  %s7 = inlined_call_operand.hbm [shape: f32[4,16,128], index: 7, kind: output, shape index: {}]
  %s8 = sld [smem:[#allocation0]]
  $region81: #{tpu_custom_call.1} parent=0
    _
  %s10 = ssub.s32 1, %s8
  %s11 = scalar_select 0, %s10, %s8
  $region1: #{tpu_custom_call.1} parent=0
    #allocation2 [shape = 'u8[32768]{0}', space=vmem, size = 0x8000, scoped, tag = 'input window, operand 0']
    #allocation3 [shape = 's32[2]{0}', space=sflag, size = 0x8, scoped, tag = 'scoped memory for tpu_custom_call.1']
    #allocation4 [shape = 's32[2]{0}', space=sflag, size = 0x8, scoped, tag = 'scoped memory for tpu_custom_call.1']
    #allocation5 [shape = 'u8[131072]{0}', space=vmem, size = 0x20000, scoped, tag = 'input window, operand 1, single buffered']
    #allocation6 [shape = 's32[1]{0}', space=sflag, size = 0x4, scoped, tag = 'scoped memory for tpu_custom_call.1']
    #allocation7 [shape = 'u8[65536]{0}', space=vmem, size = 0x10000, scoped, tag = 'input window, operand 2, single buffered']
    #allocation8 [shape = 'u8[131072]{0}', space=vmem, size = 0x20000, scoped, tag = 'input window, operand 3, single buffered']
    #allocation9 [shape = 's32[1]{0}', space=sflag, size = 0x4, scoped, tag = 'scoped memory for tpu_custom_call.1']
    #allocation10 [shape = 'u8[131072]{0}', space=vmem, size = 0x20000, scoped, tag = 'input window, operand 4, single buffered']
    #allocation11 [shape = 'u8[32768]{0}', space=vmem, size = 0x8000, scoped, tag = 'output window, operand 0']
    %12 = vsyncpa [#allocation3], 0
    %s13 = scalar_lea.sflag [#allocation3], 1
    %14 = vsyncpa %s13, 0
    %15 = vsyncpa [#allocation6], 0
    %16 = vsyncpa [#allocation9], 0
    %17 = vsyncpa [#allocation4], 0
    %s18 = scalar_lea.sflag [#allocation4], 1
    %19 = vsyncpa %s18, 0
    loop: start=0, step=1, limit=4
    $region2: #{tpu_custom_call.1} parent=1 // loop_pre_header
      _
    $region3: #{tpu_custom_call.1} parent=1 // loop_header
      %s21 = sphi 0, %s25
      %p22 = scmp.ge.s32.totalorder %s21, 4
      %s31 = sphi 0, %s33
      %s34 = sphi 0, %s31
      %s35 = sphi 0, %s34
      %s51 = sphi 0, %s35
      %s55 = sphi 0, %s55
      %s57 = sphi 0, %s55
      %s58 = sphi 0, %s57
      %s72 = sphi 0, %s58
      %s76 = sphi 0, %s76
      %s78 = sphi 0, %s76
      %s79 = sphi 0, %s78
      %s93 = sphi 0, %s79
      %s97 = sphi 0, %s97
      %s99 = sphi 0, %s97
      %s100 = sphi 0, %s99
      %s114 = sphi 0, %s100
      %s118 = sphi 0, %s118
      %s120 = sphi 0, %s118
      %s121 = sphi 0, %s120
      %s135 = sphi 0, %s121
      %s139 = sphi 0, %s139
      %s141 = sphi 0, %s139
      %s142 = sphi 0, %s141
      %s156 = sphi 0, %s142
      %s160 = sphi 0, %s160
      %s162 = sphi 0, %s160
      %s163 = sphi 0, %s162
      %s177 = sphi 0, %s163
      %s183 = sphi 0, %s185
      %s186 = sphi 0, %s183
      %s187 = sphi 0, %s186
      %s203 = sphi 0, %s187
    $region4: #{tpu_custom_call.1} parent=1 // loop_header_branch
      %24 = sbr.rel (%p22) target = $region8
    $region5: #{tpu_custom_call.1} parent=1 // loop_body
      %s26 = ssub.s32 %s21, 1
      %s27 = ssub.s32 %s21, 2
      %s28 = sadd.s32 %s21, 1
      %s29 = ssub.s32 %s21, %s28
      %p30 = scmp.eq.s32.totalorder %s29, 0
      %s32 = sadd.s32 %s31, 1
      %s33 = scalar_select %p30, %s31, %s32
      %p36 = pneg %p30
      %p37 = scmp.eq.s32.totalorder %s21, 1
      %p38 = por %p36, %p37
      %p39 = scmp.ne.s32.totalorder %s31, %s34
      %p40 = scmp.eq.s32.totalorder %s21, 0
      %p41 = por %p39, %p40
      %p42 = scmp.ne.s32.totalorder %s31, %s34
      %p43 = scmp.eq.s32.totalorder %s26, 1
      %p44 = por %p42, %p43
      %p45 = scmp.ne.s32.totalorder %s34, %s35
      %p46 = scmp.eq.s32.totalorder %s26, 0
      %p47 = por %p45, %p46
      %p48 = scmp.ne.s32.totalorder %s34, %s35
      %p49 = scmp.eq.s32.totalorder %s27, 1
      %p50 = por %p48, %p49
      %p52 = scmp.ne.s32.totalorder %s35, %s51
      %p53 = scmp.eq.s32.totalorder %s27, 0
      %p54 = por %p52, %p53
      %s56 = sadd.s32 %s55, 1
      %p59 = scmp.eq.s32.totalorder %s21, 1
      %p60 = scmp.ne.s32.totalorder %s55, %s57
      %p61 = scmp.eq.s32.totalorder %s21, 0
      %p62 = por %p60, %p61
      %p63 = scmp.ne.s32.totalorder %s55, %s57
      %p64 = scmp.eq.s32.totalorder %s26, 1
      %p65 = por %p63, %p64
      %p66 = scmp.ne.s32.totalorder %s57, %s58
      %p67 = scmp.eq.s32.totalorder %s26, 0
      %p68 = por %p66, %p67
      %p69 = scmp.ne.s32.totalorder %s57, %s58
      %p70 = scmp.eq.s32.totalorder %s27, 1
      %p71 = por %p69, %p70
      %p73 = scmp.ne.s32.totalorder %s58, %s72
      %p74 = scmp.eq.s32.totalorder %s27, 0
      %p75 = por %p73, %p74
      %s77 = sadd.s32 %s76, 1
      %p80 = scmp.eq.s32.totalorder %s21, 1
      %p81 = scmp.ne.s32.totalorder %s76, %s78
      %p82 = scmp.eq.s32.totalorder %s21, 0
      %p83 = por %p81, %p82
      %p84 = scmp.ne.s32.totalorder %s76, %s78
      %p85 = scmp.eq.s32.totalorder %s26, 1
      %p86 = por %p84, %p85
      %p87 = scmp.ne.s32.totalorder %s78, %s79
      %p88 = scmp.eq.s32.totalorder %s26, 0
      %p89 = por %p87, %p88
      %p90 = scmp.ne.s32.totalorder %s78, %s79
      %p91 = scmp.eq.s32.totalorder %s27, 1
      %p92 = por %p90, %p91
      %p94 = scmp.ne.s32.totalorder %s79, %s93
      %p95 = scmp.eq.s32.totalorder %s27, 0
      %p96 = por %p94, %p95
      %s98 = sadd.s32 %s97, 1
      %p101 = scmp.eq.s32.totalorder %s21, 1
      %p102 = scmp.ne.s32.totalorder %s97, %s99
      %p103 = scmp.eq.s32.totalorder %s21, 0
      %p104 = por %p102, %p103
      %p105 = scmp.ne.s32.totalorder %s97, %s99
      %p106 = scmp.eq.s32.totalorder %s26, 1
      %p107 = por %p105, %p106
      %p108 = scmp.ne.s32.totalorder %s99, %s100
      %p109 = scmp.eq.s32.totalorder %s26, 0
      %p110 = por %p108, %p109
      %p111 = scmp.ne.s32.totalorder %s99, %s100
      %p112 = scmp.eq.s32.totalorder %s27, 1
      %p113 = por %p111, %p112
      %p115 = scmp.ne.s32.totalorder %s100, %s114
      %p116 = scmp.eq.s32.totalorder %s27, 0
      %p117 = por %p115, %p116
      %s119 = sadd.s32 %s118, 1
      %p122 = scmp.eq.s32.totalorder %s21, 1
      %p123 = scmp.ne.s32.totalorder %s118, %s120
      %p124 = scmp.eq.s32.totalorder %s21, 0
      %p125 = por %p123, %p124
      %p126 = scmp.ne.s32.totalorder %s118, %s120
      %p127 = scmp.eq.s32.totalorder %s26, 1
      %p128 = por %p126, %p127
      %p129 = scmp.ne.s32.totalorder %s120, %s121
      %p130 = scmp.eq.s32.totalorder %s26, 0
      %p131 = por %p129, %p130
      %p132 = scmp.ne.s32.totalorder %s120, %s121
      %p133 = scmp.eq.s32.totalorder %s27, 1
      %p134 = por %p132, %p133
      %p136 = scmp.ne.s32.totalorder %s121, %s135
      %p137 = scmp.eq.s32.totalorder %s27, 0
      %p138 = por %p136, %p137
      %s140 = sadd.s32 %s139, 1
      %p143 = scmp.eq.s32.totalorder %s21, 1
      %p144 = scmp.ne.s32.totalorder %s139, %s141
      %p145 = scmp.eq.s32.totalorder %s21, 0
      %p146 = por %p144, %p145
      %p147 = scmp.ne.s32.totalorder %s139, %s141
      %p148 = scmp.eq.s32.totalorder %s26, 1
      %p149 = por %p147, %p148
      %p150 = scmp.ne.s32.totalorder %s141, %s142
      %p151 = scmp.eq.s32.totalorder %s26, 0
      %p152 = por %p150, %p151
      %p153 = scmp.ne.s32.totalorder %s141, %s142
      %p154 = scmp.eq.s32.totalorder %s27, 1
      %p155 = por %p153, %p154
      %p157 = scmp.ne.s32.totalorder %s142, %s156
      %p158 = scmp.eq.s32.totalorder %s27, 0
      %p159 = por %p157, %p158
      %s161 = sadd.s32 %s160, 1
      %p164 = scmp.eq.s32.totalorder %s21, 1
      %p165 = scmp.ne.s32.totalorder %s160, %s162
      %p166 = scmp.eq.s32.totalorder %s21, 0
      %p167 = por %p165, %p166
      %p168 = scmp.ne.s32.totalorder %s160, %s162
      %p169 = scmp.eq.s32.totalorder %s26, 1
      %p170 = por %p168, %p169
      %p171 = scmp.ne.s32.totalorder %s162, %s163
      %p172 = scmp.eq.s32.totalorder %s26, 0
      %p173 = por %p171, %p172
      %p174 = scmp.ne.s32.totalorder %s162, %s163
      %p175 = scmp.eq.s32.totalorder %s27, 1
      %p176 = por %p174, %p175
      %p178 = scmp.ne.s32.totalorder %s163, %s177
      %p179 = scmp.eq.s32.totalorder %s27, 0
      %p180 = por %p178, %p179
      %s181 = ssub.s32 %s21, %s28
      %p182 = scmp.eq.s32.totalorder %s181, 0
      %s184 = sadd.s32 %s183, 1
      %s185 = scalar_select %p182, %s183, %s184
      %p188 = pneg %p182
      %p189 = scmp.eq.s32.totalorder %s21, 1
      %p190 = por %p188, %p189
      %p191 = scmp.ne.s32.totalorder %s183, %s186
      %p192 = scmp.eq.s32.totalorder %s21, 0
      %p193 = por %p191, %p192
      %p194 = scmp.ne.s32.totalorder %s183, %s186
      %p195 = scmp.eq.s32.totalorder %s26, 1
      %p196 = por %p194, %p195
      %p197 = scmp.ne.s32.totalorder %s186, %s187
      %p198 = scmp.eq.s32.totalorder %s26, 0
      %p199 = por %p197, %p198
      %p200 = scmp.ne.s32.totalorder %s186, %s187
      %p201 = scmp.eq.s32.totalorder %s27, 1
      %p202 = por %p200, %p201
      %p204 = scmp.ne.s32.totalorder %s187, %s203
      %p205 = scmp.eq.s32.totalorder %s27, 0
      %p206 = por %p204, %p205
      %p207 = scmp.le.s32.totalorder 1, %s21
      %p208 = scmp.lt.s32.totalorder %s21, 3
      %p209 = pnand %p207, %p208
      %p210 = pneg %p209
      // Predicated region
      $region9: #{tpu_custom_call.1} parent=5 // pred_check
        _
      $region10: #{tpu_custom_call.1} parent=5 // pred_check_branch
        %212 = sbr.rel (%p209) target = $region12
      $region11: #{tpu_custom_call.1} parent=5 // pred_region
        %s213 = ssub.s32 %s21, 1
        // Predicated region
        $region13: #{tpu_custom_call.1} parent=11 // pred_check
          %p214 = pneg %p68
        $region14: #{tpu_custom_call.1} parent=11 // pred_check_branch
          %216 = sbr.rel (%p214) target = $region16
        $region15: #{tpu_custom_call.1} parent=11 // pred_region
          %s218 = ssub.s32 4096, 4096
          %219 = vsyncadd [#allocation6], %s218
          %s220 = sshll.u32 [#allocation5], 4
          %s221 = int_to_ptr.vmem [resolvable:$true] %s220
          %226 = dma.hbm_to_vmem [thread:$0]  %s1, 4096, %s221, [#allocation6], 256, 256, 16
        $region16: #{tpu_custom_call.1} parent=11 // pred_fallthru
          _
        // Predicated region
        $region17: #{tpu_custom_call.1} parent=11 // pred_check
          %p227 = pneg %p89
        $region18: #{tpu_custom_call.1} parent=11 // pred_check_branch
          %229 = sbr.rel (%p227) target = $region20
        $region19: #{tpu_custom_call.1} parent=11 // pred_region
          %s231 = ssub.s32 2048, 2048
          %232 = vsyncadd [#allocation6], %s231
          %s233 = sshll.u32 [#allocation7], 4
          %s234 = int_to_ptr.vmem [resolvable:$true] %s233
          %239 = dma.hbm_to_vmem [thread:$0]  %s2, 2048, %s234, [#allocation6], 128, 128, 8
        $region20: #{tpu_custom_call.1} parent=11 // pred_fallthru
          _
        // Predicated region
        $region21: #{tpu_custom_call.1} parent=11 // pred_check
          %p240 = pneg %p110
        $region22: #{tpu_custom_call.1} parent=11 // pred_check_branch
          %242 = sbr.rel (%p240) target = $region24
        $region23: #{tpu_custom_call.1} parent=11 // pred_region
          %s244 = ssub.s32 4096, 4096
          %245 = vsyncadd [#allocation9], %s244
          %s246 = sshll.u32 [#allocation8], 4
          %s247 = int_to_ptr.vmem [resolvable:$true] %s246
          %252 = dma.hbm_to_vmem [thread:$0]  %s3, 4096, %s247, [#allocation9], 128, 128, 8
        $region24: #{tpu_custom_call.1} parent=11 // pred_fallthru
          _
        // Predicated region
        $region25: #{tpu_custom_call.1} parent=11 // pred_check
          %p253 = pneg %p131
        $region26: #{tpu_custom_call.1} parent=11 // pred_check_branch
          %255 = sbr.rel (%p253) target = $region28
        $region27: #{tpu_custom_call.1} parent=11 // pred_region
          %s257 = ssub.s32 4096, 4096
          %258 = vsyncadd [#allocation9], %s257
          %s259 = sshll.u32 [#allocation10], 4
          %s260 = int_to_ptr.vmem [resolvable:$true] %s259
          %265 = dma.hbm_to_vmem [thread:$0]  %s4, 4096, %s260, [#allocation9], 128, 128, 8
        $region28: #{tpu_custom_call.1} parent=11 // pred_fallthru
          _
        // Predicated region
        $region29: #{tpu_custom_call.1} parent=11 // pred_check
          %p266 = pneg %p152
        $region30: #{tpu_custom_call.1} parent=11 // pred_check_branch
          %268 = sbr.rel (%p266) target = $region32
        $region31: #{tpu_custom_call.1} parent=11 // pred_region
          _
        $region32: #{tpu_custom_call.1} parent=11 // pred_fallthru
          _
        // Predicated region
        $region33: #{tpu_custom_call.1} parent=11 // pred_check
          %p269 = pneg %p173
        $region34: #{tpu_custom_call.1} parent=11 // pred_check_branch
          %271 = sbr.rel (%p269) target = $region36
        $region35: #{tpu_custom_call.1} parent=11 // pred_region
          _
        $region36: #{tpu_custom_call.1} parent=11 // pred_fallthru
          _
      $region12: #{tpu_custom_call.1} parent=5 // pred_fallthru
        _
      %p272 = scmp.lt.s32.totalorder %s21, 2
      // Predicated region
      $region37: #{tpu_custom_call.1} parent=5 // pred_check
        %p273 = pneg %p272
      $region38: #{tpu_custom_call.1} parent=5 // pred_check_branch
        %275 = sbr.rel (%p273) target = $region40
      $region39: #{tpu_custom_call.1} parent=5 // pred_region
        // Predicated region
        $region41: #{tpu_custom_call.1} parent=39 // pred_check
          %p276 = pneg %p41
        $region42: #{tpu_custom_call.1} parent=39 // pred_check_branch
          %278 = sbr.rel (%p276) target = $region44
        $region43: #{tpu_custom_call.1} parent=39 // pred_region
          %s279 = sand.u32 %s31, 1
          %s280 = scalar_lea.sflag [#allocation3], %s279
          %s281 = sand.u32 %s31, 1
          %s282 = smul.addr %s281, 32
          %s283 = scalar_lea.vmem [#allocation2], %s282
          %s284 = smul.u32 2, %s21
          %s286 = ssub.s32 512, 512
          %287 = vsyncadd %s280, %s286
          %s288 = smul.addr %s284, 2
          %s289 = smul.addr %s288, 128
          %s290 = scalar_lea.hbm %s0, %s289
          %s291 = sshll.u32 %s283, 4
          %s292 = int_to_ptr.vmem [resolvable:$true] %s291
          %297 = dma.hbm_to_vmem [thread:$0]  %s290, 512, %s292, %s280, 128, 128, 8
        $region44: #{tpu_custom_call.1} parent=39 // pred_fallthru
          _
      $region40: #{tpu_custom_call.1} parent=5 // pred_fallthru
        _
      %p298 = scmp.le.s32.totalorder 1, %s21
      %p299 = scmp.lt.s32.totalorder %s21, 3
      %p300 = pnand %p298, %p299
      %p301 = pneg %p300
      // Predicated region
      $region45: #{tpu_custom_call.1} parent=5 // pred_check
        _
      $region46: #{tpu_custom_call.1} parent=5 // pred_check_branch
        %303 = sbr.rel (%p300) target = $region48
      $region47: #{tpu_custom_call.1} parent=5 // pred_region
        %s304 = ssub.s32 %s21, 1
        %s305 = sand.u32 %s34, 1
        %s306 = scalar_lea.sflag [#allocation3], %s305
        %s307 = sand.u32 %s34, 1
        %s308 = smul.addr %s307, 32
        %s309 = scalar_lea.vmem [#allocation2], %s308
        // Predicated region
        $region49: #{tpu_custom_call.1} parent=47 // pred_check
          %p310 = pneg %p47
        $region50: #{tpu_custom_call.1} parent=47 // pred_check_branch
          %312 = sbr.rel (%p310) target = $region52
        $region51: #{tpu_custom_call.1} parent=47 // pred_region
          %313 = dma.done %s306, 512
        $region52: #{tpu_custom_call.1} parent=47 // pred_fallthru
          _
        // Predicated region
        $region53: #{tpu_custom_call.1} parent=47 // pred_check
          %p314 = pneg %p68
        $region54: #{tpu_custom_call.1} parent=47 // pred_check_branch
          %316 = sbr.rel (%p314) target = $region56
        $region55: #{tpu_custom_call.1} parent=47 // pred_region
          %317 = dma.done [#allocation6], 4096
        $region56: #{tpu_custom_call.1} parent=47 // pred_fallthru
          _
        // Predicated region
        $region57: #{tpu_custom_call.1} parent=47 // pred_check
          %p318 = pneg %p89
        $region58: #{tpu_custom_call.1} parent=47 // pred_check_branch
          %320 = sbr.rel (%p318) target = $region60
        $region59: #{tpu_custom_call.1} parent=47 // pred_region
          %321 = dma.done [#allocation6], 2048
        $region60: #{tpu_custom_call.1} parent=47 // pred_fallthru
          _
        // Predicated region
        $region61: #{tpu_custom_call.1} parent=47 // pred_check
          %p322 = pneg %p110
        $region62: #{tpu_custom_call.1} parent=47 // pred_check_branch
          %324 = sbr.rel (%p322) target = $region64
        $region63: #{tpu_custom_call.1} parent=47 // pred_region
          %325 = dma.done [#allocation9], 4096
        $region64: #{tpu_custom_call.1} parent=47 // pred_fallthru
          _
        // Predicated region
        $region65: #{tpu_custom_call.1} parent=47 // pred_check
          %p326 = pneg %p131
        $region66: #{tpu_custom_call.1} parent=47 // pred_check_branch
          %328 = sbr.rel (%p326) target = $region68
        $region67: #{tpu_custom_call.1} parent=47 // pred_region
          %329 = dma.done [#allocation9], 4096
        $region68: #{tpu_custom_call.1} parent=47 // pred_fallthru
          _
        %s330 = sand.u32 %s34, 1
        %s331 = scalar_lea.sflag [#allocation3], %s330
        %s332 = sand.u32 %s34, 1
        %s333 = smul.addr %s332, 32
        %s334 = scalar_lea.vmem [#allocation2], %s333
        %p335 = pneg %p47
        %p336 = pneg %p44
        %p337 = pneg %p68
        %p338 = pneg %p65
        %p339 = pneg %p89
        %p340 = pneg %p86
        %p341 = pneg %p110
        %p342 = pneg %p107
        %p343 = pneg %p131
        %p344 = pneg %p128
        %p345 = pneg %p152
        %p346 = pneg %p149
        %p347 = pneg %p173
        %p348 = pneg %p170
        %p349 = pneg %p199
        %p350 = pneg %p196
        %s351 = sand.u32 %s186, 1
        %s352 = scalar_lea.sflag [#allocation4], %s351
        %s353 = sand.u32 %s186, 1
        %s354 = smul.addr %s353, 32
        %s355 = scalar_lea.vmem [#allocation11], %s354
        %s356 = smul.u32 2, %s26
        %s357 = smul.u32 2, %s26
        %v358 = vld [vmem:[%s309] sm:$0xff]
        %v359 = vld [vmem:[%s309 + $0x8] sm:$0xff]
        %v360 = vld [vmem:[%s309 + $0x10] sm:$0xff]
        %v361 = vld [vmem:[%s309 + $0x18] sm:$0xff]
        %v362 = vld [vmem:[#allocation5] sm:$0xff]
        %v363 = vld [vmem:[#allocation5 + $0x8] sm:$0xff]
        %v364 = vld [vmem:[#allocation5 + $0x10] sm:$0xff]
        %v365 = vld [vmem:[#allocation5 + $0x18] sm:$0xff]
        %v366 = vld [vmem:[#allocation5 + $0x20] sm:$0xff]
        %v367 = vld [vmem:[#allocation5 + $0x28] sm:$0xff]
        %v368 = vld [vmem:[#allocation5 + $0x30] sm:$0xff]
        %v369 = vld [vmem:[#allocation5 + $0x38] sm:$0xff]
        %v370 = vld [vmem:[#allocation5 + $0x40] sm:$0xff]
        %v371 = vld [vmem:[#allocation5 + $0x48] sm:$0xff]
        %v372 = vld [vmem:[#allocation5 + $0x50] sm:$0xff]
        %v373 = vld [vmem:[#allocation5 + $0x58] sm:$0xff]
        %v374 = vld [vmem:[#allocation5 + $0x60] sm:$0xff]
        %v375 = vld [vmem:[#allocation5 + $0x68] sm:$0xff]
        %v376 = vld [vmem:[#allocation5 + $0x70] sm:$0xff]
        %v377 = vld [vmem:[#allocation5 + $0x78] sm:$0xff]
        %v378 = vld [vmem:[#allocation5 + $0x80] sm:$0xff]
        %v379 = vld [vmem:[#allocation5 + $0x88] sm:$0xff]
        %v380 = vld [vmem:[#allocation5 + $0x90] sm:$0xff]
        %v381 = vld [vmem:[#allocation5 + $0x98] sm:$0xff]
        %v382 = vld [vmem:[#allocation5 + $0xa0] sm:$0xff]
        %v383 = vld [vmem:[#allocation5 + $0xa8] sm:$0xff]
        %v384 = vld [vmem:[#allocation5 + $0xb0] sm:$0xff]
        %v385 = vld [vmem:[#allocation5 + $0xb8] sm:$0xff]
        %v386 = vld [vmem:[#allocation5 + $0xc0] sm:$0xff]
        %v387 = vld [vmem:[#allocation5 + $0xc8] sm:$0xff]
        %v388 = vld [vmem:[#allocation5 + $0xd0] sm:$0xff]
        %v389 = vld [vmem:[#allocation5 + $0xd8] sm:$0xff]
        %v390 = vld [vmem:[#allocation5 + $0xe0] sm:$0xff]
        %v391 = vld [vmem:[#allocation5 + $0xe8] sm:$0xff]
        %v392 = vld [vmem:[#allocation5 + $0xf0] sm:$0xff]
        %v393 = vld [vmem:[#allocation5 + $0xf8] sm:$0xff]
        %394 = vmatprep.subr.mxu0 %v393
        %395 = vmatpush1.msra.mxu0 %v392
        %396 = vmatprep.subr.mxu0 %v391
        %397 = vmatpush1.msra.mxu0 %v390
        %398 = vmatprep.subr.mxu0 %v389
        %399 = vmatpush1.msra.mxu0 %v388
        %400 = vmatprep.subr.mxu0 %v387
        %401 = vmatpush1.msra.mxu0 %v386
        %402 = vmatprep.subr.mxu0 %v385
        %403 = vmatpush1.msra.mxu0 %v384
        %404 = vmatprep.subr.mxu0 %v383
        %405 = vmatpush1.msra.mxu0 %v382
        %406 = vmatprep.subr.mxu0 %v381
        %407 = vmatpush1.msra.mxu0 %v380
        %408 = vmatprep.subr.mxu0 %v379
        %409 = vmatpush1.msra.mxu0 %v378
        %410 = vmatprep.subr.mxu0 %v377
        %411 = vmatpush1.msra.mxu0 %v376
        %412 = vmatprep.subr.mxu0 %v375
        %413 = vmatpush1.msra.mxu0 %v374
        %414 = vmatprep.subr.mxu0 %v373
        %415 = vmatpush1.msra.mxu0 %v372
        %416 = vmatprep.subr.mxu0 %v371
        %417 = vmatpush1.msra.mxu0 %v370
        %418 = vmatprep.subr.mxu0 %v369
        %419 = vmatpush1.msra.mxu0 %v368
        %420 = vmatprep.subr.mxu0 %v367
        %421 = vmatpush1.msra.mxu0 %v366
        %422 = vmatprep.subr.mxu0 %v365
        %423 = vmatpush1.msra.mxu0 %v364
        %424 = vmatprep.subr.mxu0 %v363
        %425 = vmatpush1.msra.mxu0 %v362
        %426 = vmatprep.subr.mxu0 0.0
        %427 = vmatpush2.msra.mxu0 0.0
        %428 = vmatprep.subr.mxu0 0.0
        %429 = vmatpush2.msra.mxu0 0.0
        %430 = vmatprep.subr.mxu0 0.0
        %431 = vmatpush2.msra.mxu0 0.0
        %432 = vmatprep.subr.mxu0 0.0
        %433 = vmatpush2.msra.mxu0 0.0
        %434 = vmatprep.subr.mxu0 0.0
        %435 = vmatpush2.msra.mxu0 0.0
        %436 = vmatprep.subr.mxu0 0.0
        %437 = vmatpush2.msra.mxu0 0.0
        %438 = vmatprep.subr.mxu0 0.0
        %439 = vmatpush2.msra.mxu0 0.0
        %440 = vmatprep.subr.mxu0 0.0
        %441 = vmatpush2.msra.mxu0 0.0
        %442 = vmatprep.subr.mxu0 0.0
        %443 = vmatpush2.msra.mxu0 0.0
        %444 = vmatprep.subr.mxu0 0.0
        %445 = vmatpush2.msra.mxu0 0.0
        %446 = vmatprep.subr.mxu0 0.0
        %447 = vmatpush2.msra.mxu0 0.0
        %448 = vmatprep.subr.mxu0 0.0
        %449 = vmatpush2.msra.mxu0 0.0
        %450 = vmatprep.subr.mxu0 0.0
        %451 = vmatpush2.msra.mxu0 0.0
        %452 = vmatprep.subr.mxu0 0.0
        %453 = vmatpush2.msra.mxu0 0.0
        %454 = vmatprep.subr.mxu0 0.0
        %455 = vmatpush2.msra.mxu0 0.0
        %456 = vmatprep.subr.mxu0 0.0
        %457 = vmatpush2.msra.mxu0 0.0
        %458 = vmatprep.mubr.f32.mxu0 0.0
        %459 = vmatmul.mubr.f32.gmra.mxu0 %v358
        %v460 = vpop.f32.mrf.mxu0
        %v461 = vadd.f32 0.0, %v460
        %v462 = vpop.f32.mrf.mxu0
        %v463 = vadd.f32 0.0, %v462
        %464 = vmatprep.mubr.f32.mxu0 0.0
        %465 = vmatmul.mubr.f32.gmra.mxu0 %v359
        %v466 = vpop.f32.mrf.mxu0
        %v467 = vadd.f32 0.0, %v466
        %v468 = vpop.f32.mrf.mxu0
        %v469 = vadd.f32 0.0, %v468
        %470 = vmatprep.mubr.f32.mxu0 0.0
        %471 = vmatmul.mubr.f32.gmra.mxu0 %v360
        %v472 = vpop.f32.mrf.mxu0
        %v473 = vadd.f32 0.0, %v472
        %v474 = vpop.f32.mrf.mxu0
        %v475 = vadd.f32 0.0, %v474
        %476 = vmatprep.mubr.f32.mxu0 0.0
        %477 = vmatmul.mubr.f32.gmra.mxu0 %v361
        %v478 = vpop.f32.mrf.mxu0
        %v479 = vadd.f32 0.0, %v478
        %v480 = vpop.f32.mrf.mxu0
        %v481 = vadd.f32 0.0, %v480
        %482 = vdwg.mxu0
        %v483 = vld [vmem:[#allocation8] sm:$0xff]
        %v484 = vld [vmem:[#allocation8 + $0x8] sm:$0xff]
        %v485 = vld [vmem:[#allocation8 + $0x10] sm:$0xff]
        %v486 = vld [vmem:[#allocation8 + $0x18] sm:$0xff]
        %v487 = vld [vmem:[#allocation8 + $0x20] sm:$0xff]
        %v488 = vld [vmem:[#allocation8 + $0x28] sm:$0xff]
        %v489 = vld [vmem:[#allocation8 + $0x30] sm:$0xff]
        %v490 = vld [vmem:[#allocation8 + $0x38] sm:$0xff]
        %v491 = vld [vmem:[#allocation8 + $0x40] sm:$0xff]
        %v492 = vld [vmem:[#allocation8 + $0x48] sm:$0xff]
        %v493 = vld [vmem:[#allocation8 + $0x50] sm:$0xff]
        %v494 = vld [vmem:[#allocation8 + $0x58] sm:$0xff]
        %v495 = vld [vmem:[#allocation8 + $0x60] sm:$0xff]
        %v496 = vld [vmem:[#allocation8 + $0x68] sm:$0xff]
        %v497 = vld [vmem:[#allocation8 + $0x70] sm:$0xff]
        %v498 = vld [vmem:[#allocation8 + $0x78] sm:$0xff]
        %v499 = vld [vmem:[#allocation8 + $0x80] sm:$0xff]
        %v500 = vld [vmem:[#allocation8 + $0x88] sm:$0xff]
        %v501 = vld [vmem:[#allocation8 + $0x90] sm:$0xff]
        %v502 = vld [vmem:[#allocation8 + $0x98] sm:$0xff]
        %v503 = vld [vmem:[#allocation8 + $0xa0] sm:$0xff]
        %v504 = vld [vmem:[#allocation8 + $0xa8] sm:$0xff]
        %v505 = vld [vmem:[#allocation8 + $0xb0] sm:$0xff]
        %v506 = vld [vmem:[#allocation8 + $0xb8] sm:$0xff]
        %v507 = vld [vmem:[#allocation8 + $0xc0] sm:$0xff]
        %v508 = vld [vmem:[#allocation8 + $0xc8] sm:$0xff]
        %v509 = vld [vmem:[#allocation8 + $0xd0] sm:$0xff]
        %v510 = vld [vmem:[#allocation8 + $0xd8] sm:$0xff]
        %v511 = vld [vmem:[#allocation8 + $0xe0] sm:$0xff]
        %v512 = vld [vmem:[#allocation8 + $0xe8] sm:$0xff]
        %v513 = vld [vmem:[#allocation8 + $0xf0] sm:$0xff]
        %v514 = vld [vmem:[#allocation8 + $0xf8] sm:$0xff]
        %v515 = vld [vmem:[#allocation10] sm:$0xff]
        %v516 = vld [vmem:[#allocation10 + $0x8] sm:$0xff]
        %v517 = vld [vmem:[#allocation10 + $0x10] sm:$0xff]
        %v518 = vld [vmem:[#allocation10 + $0x18] sm:$0xff]
        %v519 = vld [vmem:[#allocation10 + $0x20] sm:$0xff]
        %v520 = vld [vmem:[#allocation10 + $0x28] sm:$0xff]
        %v521 = vld [vmem:[#allocation10 + $0x30] sm:$0xff]
        %v522 = vld [vmem:[#allocation10 + $0x38] sm:$0xff]
        %v523 = vld [vmem:[#allocation10 + $0x40] sm:$0xff]
        %v524 = vld [vmem:[#allocation10 + $0x48] sm:$0xff]
        %v525 = vld [vmem:[#allocation10 + $0x50] sm:$0xff]
        %v526 = vld [vmem:[#allocation10 + $0x58] sm:$0xff]
        %v527 = vld [vmem:[#allocation10 + $0x60] sm:$0xff]
        %v528 = vld [vmem:[#allocation10 + $0x68] sm:$0xff]
        %v529 = vld [vmem:[#allocation10 + $0x70] sm:$0xff]
        %v530 = vld [vmem:[#allocation10 + $0x78] sm:$0xff]
        %v531 = vld [vmem:[#allocation10 + $0x80] sm:$0xff]
        %v532 = vld [vmem:[#allocation10 + $0x88] sm:$0xff]
        %v533 = vld [vmem:[#allocation10 + $0x90] sm:$0xff]
        %v534 = vld [vmem:[#allocation10 + $0x98] sm:$0xff]
        %v535 = vld [vmem:[#allocation10 + $0xa0] sm:$0xff]
        %v536 = vld [vmem:[#allocation10 + $0xa8] sm:$0xff]
        %v537 = vld [vmem:[#allocation10 + $0xb0] sm:$0xff]
        %v538 = vld [vmem:[#allocation10 + $0xb8] sm:$0xff]
        %v539 = vld [vmem:[#allocation10 + $0xc0] sm:$0xff]
        %v540 = vld [vmem:[#allocation10 + $0xc8] sm:$0xff]
        %v541 = vld [vmem:[#allocation10 + $0xd0] sm:$0xff]
        %v542 = vld [vmem:[#allocation10 + $0xd8] sm:$0xff]
        %v543 = vld [vmem:[#allocation10 + $0xe0] sm:$0xff]
        %v544 = vld [vmem:[#allocation10 + $0xe8] sm:$0xff]
        %v545 = vld [vmem:[#allocation10 + $0xf0] sm:$0xff]
        %v546 = vld [vmem:[#allocation10 + $0xf8] sm:$0xff]
        %v547 = vmul.f32 %v461, %v483
        %v548 = vmul.f32 %v467, %v484
        %v549 = vmul.f32 %v461, %v485
        %v550 = vmul.f32 %v467, %v486
        %v551 = vmul.f32 %v461, %v487
        %v552 = vmul.f32 %v467, %v488
        %v553 = vmul.f32 %v461, %v489
        %v554 = vmul.f32 %v467, %v490
        %v555 = vmul.f32 %v461, %v491
        %v556 = vmul.f32 %v467, %v492
        %v557 = vmul.f32 %v461, %v493
        %v558 = vmul.f32 %v467, %v494
        %v559 = vmul.f32 %v461, %v495
        %v560 = vmul.f32 %v467, %v496
        %v561 = vmul.f32 %v461, %v497
        %v562 = vmul.f32 %v467, %v498
        %v563 = vmul.f32 %v461, %v499
        %v564 = vmul.f32 %v467, %v500
        %v565 = vmul.f32 %v461, %v501
        %v566 = vmul.f32 %v467, %v502
        %v567 = vmul.f32 %v461, %v503
        %v568 = vmul.f32 %v467, %v504
        %v569 = vmul.f32 %v461, %v505
        %v570 = vmul.f32 %v467, %v506
        %v571 = vmul.f32 %v461, %v507
        %v572 = vmul.f32 %v467, %v508
        %v573 = vmul.f32 %v461, %v509
        %v574 = vmul.f32 %v467, %v510
        %v575 = vmul.f32 %v461, %v511
        %v576 = vmul.f32 %v467, %v512
        %v577 = vmul.f32 %v461, %v513
        %v578 = vmul.f32 %v467, %v514
        %v579 = vmul.f32 %v473, %v483
        %v580 = vmul.f32 %v479, %v484
        %v581 = vmul.f32 %v473, %v485
        %v582 = vmul.f32 %v479, %v486
        %v583 = vmul.f32 %v473, %v487
        %v584 = vmul.f32 %v479, %v488
        %v585 = vmul.f32 %v473, %v489
        %v586 = vmul.f32 %v479, %v490
        %v587 = vmul.f32 %v473, %v491
        %v588 = vmul.f32 %v479, %v492
        %v589 = vmul.f32 %v473, %v493
        %v590 = vmul.f32 %v479, %v494
        %v591 = vmul.f32 %v473, %v495
        %v592 = vmul.f32 %v479, %v496
        %v593 = vmul.f32 %v473, %v497
        %v594 = vmul.f32 %v479, %v498
        %v595 = vmul.f32 %v473, %v499
        %v596 = vmul.f32 %v479, %v500
        %v597 = vmul.f32 %v473, %v501
        %v598 = vmul.f32 %v479, %v502
        %v599 = vmul.f32 %v473, %v503
        %v600 = vmul.f32 %v479, %v504
        %v601 = vmul.f32 %v473, %v505
        %v602 = vmul.f32 %v479, %v506
        %v603 = vmul.f32 %v473, %v507
        %v604 = vmul.f32 %v479, %v508
        %v605 = vmul.f32 %v473, %v509
        %v606 = vmul.f32 %v479, %v510
        %v607 = vmul.f32 %v473, %v511
        %v608 = vmul.f32 %v479, %v512
        %v609 = vmul.f32 %v473, %v513
        %v610 = vmul.f32 %v479, %v514
        %v611 = vmul.f32 %v463, %v515
        %v612 = vmul.f32 %v469, %v516
        %v613 = vmul.f32 %v463, %v517
        %v614 = vmul.f32 %v469, %v518
        %v615 = vmul.f32 %v463, %v519
        %v616 = vmul.f32 %v469, %v520
        %v617 = vmul.f32 %v463, %v521
        %v618 = vmul.f32 %v469, %v522
        %v619 = vmul.f32 %v463, %v523
        %v620 = vmul.f32 %v469, %v524
        %v621 = vmul.f32 %v463, %v525
        %v622 = vmul.f32 %v469, %v526
        %v623 = vmul.f32 %v463, %v527
        %v624 = vmul.f32 %v469, %v528
        %v625 = vmul.f32 %v463, %v529
        %v626 = vmul.f32 %v469, %v530
        %v627 = vmul.f32 %v463, %v531
        %v628 = vmul.f32 %v469, %v532
        %v629 = vmul.f32 %v463, %v533
        %v630 = vmul.f32 %v469, %v534
        %v631 = vmul.f32 %v463, %v535
        %v632 = vmul.f32 %v469, %v536
        %v633 = vmul.f32 %v463, %v537
        %v634 = vmul.f32 %v469, %v538
        %v635 = vmul.f32 %v463, %v539
        %v636 = vmul.f32 %v469, %v540
        %v637 = vmul.f32 %v463, %v541
        %v638 = vmul.f32 %v469, %v542
        %v639 = vmul.f32 %v463, %v543
        %v640 = vmul.f32 %v469, %v544
        %v641 = vmul.f32 %v463, %v545
        %v642 = vmul.f32 %v469, %v546
        %v643 = vmul.f32 %v475, %v515
        %v644 = vmul.f32 %v481, %v516
        %v645 = vmul.f32 %v475, %v517
        %v646 = vmul.f32 %v481, %v518
        %v647 = vmul.f32 %v475, %v519
        %v648 = vmul.f32 %v481, %v520
        %v649 = vmul.f32 %v475, %v521
        %v650 = vmul.f32 %v481, %v522
        %v651 = vmul.f32 %v475, %v523
        %v652 = vmul.f32 %v481, %v524
        %v653 = vmul.f32 %v475, %v525
        %v654 = vmul.f32 %v481, %v526
        %v655 = vmul.f32 %v475, %v527
        %v656 = vmul.f32 %v481, %v528
        %v657 = vmul.f32 %v475, %v529
        %v658 = vmul.f32 %v481, %v530
        %v659 = vmul.f32 %v475, %v531
        %v660 = vmul.f32 %v481, %v532
        %v661 = vmul.f32 %v475, %v533
        %v662 = vmul.f32 %v481, %v534
        %v663 = vmul.f32 %v475, %v535
        %v664 = vmul.f32 %v481, %v536
        %v665 = vmul.f32 %v475, %v537
        %v666 = vmul.f32 %v481, %v538
        %v667 = vmul.f32 %v475, %v539
        %v668 = vmul.f32 %v481, %v540
        %v669 = vmul.f32 %v475, %v541
        %v670 = vmul.f32 %v481, %v542
        %v671 = vmul.f32 %v475, %v543
        %v672 = vmul.f32 %v481, %v544
        %v673 = vmul.f32 %v475, %v545
        %v674 = vmul.f32 %v481, %v546
        %v675 = vadd.f32 %v547, %v611
        %v676 = vadd.f32 %v548, %v612
        %v677 = vadd.f32 %v549, %v613
        %v678 = vadd.f32 %v550, %v614
        %v679 = vadd.f32 %v551, %v615
        %v680 = vadd.f32 %v552, %v616
        %v681 = vadd.f32 %v553, %v617
        %v682 = vadd.f32 %v554, %v618
        %v683 = vadd.f32 %v555, %v619
        %v684 = vadd.f32 %v556, %v620
        %v685 = vadd.f32 %v557, %v621
        %v686 = vadd.f32 %v558, %v622
        %v687 = vadd.f32 %v559, %v623
        %v688 = vadd.f32 %v560, %v624
        %v689 = vadd.f32 %v561, %v625
        %v690 = vadd.f32 %v562, %v626
        %v691 = vadd.f32 %v563, %v627
        %v692 = vadd.f32 %v564, %v628
        %v693 = vadd.f32 %v565, %v629
        %v694 = vadd.f32 %v566, %v630
        %v695 = vadd.f32 %v567, %v631
        %v696 = vadd.f32 %v568, %v632
        %v697 = vadd.f32 %v569, %v633
        %v698 = vadd.f32 %v570, %v634
        %v699 = vadd.f32 %v571, %v635
        %v700 = vadd.f32 %v572, %v636
        %v701 = vadd.f32 %v573, %v637
        %v702 = vadd.f32 %v574, %v638
        %v703 = vadd.f32 %v575, %v639
        %v704 = vadd.f32 %v576, %v640
        %v705 = vadd.f32 %v577, %v641
        %v706 = vadd.f32 %v578, %v642
        %v707 = vadd.f32 %v579, %v643
        %v708 = vadd.f32 %v580, %v644
        %v709 = vadd.f32 %v581, %v645
        %v710 = vadd.f32 %v582, %v646
        %v711 = vadd.f32 %v583, %v647
        %v712 = vadd.f32 %v584, %v648
        %v713 = vadd.f32 %v585, %v649
        %v714 = vadd.f32 %v586, %v650
        %v715 = vadd.f32 %v587, %v651
        %v716 = vadd.f32 %v588, %v652
        %v717 = vadd.f32 %v589, %v653
        %v718 = vadd.f32 %v590, %v654
        %v719 = vadd.f32 %v591, %v655
        %v720 = vadd.f32 %v592, %v656
        %v721 = vadd.f32 %v593, %v657
        %v722 = vadd.f32 %v594, %v658
        %v723 = vadd.f32 %v595, %v659
        %v724 = vadd.f32 %v596, %v660
        %v725 = vadd.f32 %v597, %v661
        %v726 = vadd.f32 %v598, %v662
        %v727 = vadd.f32 %v599, %v663
        %v728 = vadd.f32 %v600, %v664
        %v729 = vadd.f32 %v601, %v665
        %v730 = vadd.f32 %v602, %v666
        %v731 = vadd.f32 %v603, %v667
        %v732 = vadd.f32 %v604, %v668
        %v733 = vadd.f32 %v605, %v669
        %v734 = vadd.f32 %v606, %v670
        %v735 = vadd.f32 %v607, %v671
        %v736 = vadd.f32 %v608, %v672
        %v737 = vadd.f32 %v609, %v673
        %v738 = vadd.f32 %v610, %v674
        %v739 = vadd.f32 %v675, %v676
        %v740 = vrot.slane %v739, 4
        %v741 = vadd.f32 %v739, %v740
        %v742 = vrot.slane %v741, 2
        %v743 = vadd.f32 %v741, %v742
        %v744 = vrot.slane %v743, 1
        %v745 = vadd.f32 %v743, %v744
        %v746 = vadd.f32 %v677, %v678
        %v747 = vrot.slane %v746, 4
        %v748 = vadd.f32 %v746, %v747
        %v749 = vrot.slane %v748, 2
        %v750 = vadd.f32 %v748, %v749
        %v751 = vrot.slane %v750, 1
        %v752 = vadd.f32 %v750, %v751
        %v753 = vadd.f32 %v679, %v680
        %v754 = vrot.slane %v753, 4
        %v755 = vadd.f32 %v753, %v754
        %v756 = vrot.slane %v755, 2
        %v757 = vadd.f32 %v755, %v756
        %v758 = vrot.slane %v757, 1
        %v759 = vadd.f32 %v757, %v758
        %v760 = vadd.f32 %v681, %v682
        %v761 = vrot.slane %v760, 4
        %v762 = vadd.f32 %v760, %v761
        %v763 = vrot.slane %v762, 2
        %v764 = vadd.f32 %v762, %v763
        %v765 = vrot.slane %v764, 1
        %v766 = vadd.f32 %v764, %v765
        %v767 = vadd.f32 %v683, %v684
        %v768 = vrot.slane %v767, 4
        %v769 = vadd.f32 %v767, %v768
        %v770 = vrot.slane %v769, 2
        %v771 = vadd.f32 %v769, %v770
        %v772 = vrot.slane %v771, 1
        %v773 = vadd.f32 %v771, %v772
        %v774 = vadd.f32 %v685, %v686
        %v775 = vrot.slane %v774, 4
        %v776 = vadd.f32 %v774, %v775
        %v777 = vrot.slane %v776, 2
        %v778 = vadd.f32 %v776, %v777
        %v779 = vrot.slane %v778, 1
        %v780 = vadd.f32 %v778, %v779
        %v781 = vadd.f32 %v687, %v688
        %v782 = vrot.slane %v781, 4
        %v783 = vadd.f32 %v781, %v782
        %v784 = vrot.slane %v783, 2
        %v785 = vadd.f32 %v783, %v784
        %v786 = vrot.slane %v785, 1
        %v787 = vadd.f32 %v785, %v786
        %v788 = vadd.f32 %v689, %v690
        %v789 = vrot.slane %v788, 4
        %v790 = vadd.f32 %v788, %v789
        %v791 = vrot.slane %v790, 2
        %v792 = vadd.f32 %v790, %v791
        %v793 = vrot.slane %v792, 1
        %v794 = vadd.f32 %v792, %v793
        %v795 = vadd.f32 %v691, %v692
        %v796 = vrot.slane %v795, 4
        %v797 = vadd.f32 %v795, %v796
        %v798 = vrot.slane %v797, 2
        %v799 = vadd.f32 %v797, %v798
        %v800 = vrot.slane %v799, 1
        %v801 = vadd.f32 %v799, %v800
        %v802 = vadd.f32 %v693, %v694
        %v803 = vrot.slane %v802, 4
        %v804 = vadd.f32 %v802, %v803
        %v805 = vrot.slane %v804, 2
        %v806 = vadd.f32 %v804, %v805
        %v807 = vrot.slane %v806, 1
        %v808 = vadd.f32 %v806, %v807
        %v809 = vadd.f32 %v695, %v696
        %v810 = vrot.slane %v809, 4
        %v811 = vadd.f32 %v809, %v810
        %v812 = vrot.slane %v811, 2
        %v813 = vadd.f32 %v811, %v812
        %v814 = vrot.slane %v813, 1
        %v815 = vadd.f32 %v813, %v814
        %v816 = vadd.f32 %v697, %v698
        %v817 = vrot.slane %v816, 4
        %v818 = vadd.f32 %v816, %v817
        %v819 = vrot.slane %v818, 2
        %v820 = vadd.f32 %v818, %v819
        %v821 = vrot.slane %v820, 1
        %v822 = vadd.f32 %v820, %v821
        %v823 = vadd.f32 %v699, %v700
        %v824 = vrot.slane %v823, 4
        %v825 = vadd.f32 %v823, %v824
        %v826 = vrot.slane %v825, 2
        %v827 = vadd.f32 %v825, %v826
        %v828 = vrot.slane %v827, 1
        %v829 = vadd.f32 %v827, %v828
        %v830 = vadd.f32 %v701, %v702
        %v831 = vrot.slane %v830, 4
        %v832 = vadd.f32 %v830, %v831
        %v833 = vrot.slane %v832, 2
        %v834 = vadd.f32 %v832, %v833
        %v835 = vrot.slane %v834, 1
        %v836 = vadd.f32 %v834, %v835
        %v837 = vadd.f32 %v703, %v704
        %v838 = vrot.slane %v837, 4
        %v839 = vadd.f32 %v837, %v838
        %v840 = vrot.slane %v839, 2
        %v841 = vadd.f32 %v839, %v840
        %v842 = vrot.slane %v841, 1
        %v843 = vadd.f32 %v841, %v842
        %v844 = vadd.f32 %v705, %v706
        %v845 = vrot.slane %v844, 4
        %v846 = vadd.f32 %v844, %v845
        %v847 = vrot.slane %v846, 2
        %v848 = vadd.f32 %v846, %v847
        %v849 = vrot.slane %v848, 1
        %v850 = vadd.f32 %v848, %v849
        %v851 = vadd.f32 %v707, %v708
        %v852 = vrot.slane %v851, 4
        %v853 = vadd.f32 %v851, %v852
        %v854 = vrot.slane %v853, 2
        %v855 = vadd.f32 %v853, %v854
        %v856 = vrot.slane %v855, 1
        %v857 = vadd.f32 %v855, %v856
        %v858 = vadd.f32 %v709, %v710
        %v859 = vrot.slane %v858, 4
        %v860 = vadd.f32 %v858, %v859
        %v861 = vrot.slane %v860, 2
        %v862 = vadd.f32 %v860, %v861
        %v863 = vrot.slane %v862, 1
        %v864 = vadd.f32 %v862, %v863
        %v865 = vadd.f32 %v711, %v712
        %v866 = vrot.slane %v865, 4
        %v867 = vadd.f32 %v865, %v866
        %v868 = vrot.slane %v867, 2
        %v869 = vadd.f32 %v867, %v868
        %v870 = vrot.slane %v869, 1
        %v871 = vadd.f32 %v869, %v870
        %v872 = vadd.f32 %v713, %v714
        %v873 = vrot.slane %v872, 4
        %v874 = vadd.f32 %v872, %v873
        %v875 = vrot.slane %v874, 2
        %v876 = vadd.f32 %v874, %v875
        %v877 = vrot.slane %v876, 1
        %v878 = vadd.f32 %v876, %v877
        %v879 = vadd.f32 %v715, %v716
        %v880 = vrot.slane %v879, 4
        %v881 = vadd.f32 %v879, %v880
        %v882 = vrot.slane %v881, 2
        %v883 = vadd.f32 %v881, %v882
        %v884 = vrot.slane %v883, 1
        %v885 = vadd.f32 %v883, %v884
        %v886 = vadd.f32 %v717, %v718
        %v887 = vrot.slane %v886, 4
        %v888 = vadd.f32 %v886, %v887
        %v889 = vrot.slane %v888, 2
        %v890 = vadd.f32 %v888, %v889
        %v891 = vrot.slane %v890, 1
        %v892 = vadd.f32 %v890, %v891
        %v893 = vadd.f32 %v719, %v720
        %v894 = vrot.slane %v893, 4
        %v895 = vadd.f32 %v893, %v894
        %v896 = vrot.slane %v895, 2
        %v897 = vadd.f32 %v895, %v896
        %v898 = vrot.slane %v897, 1
        %v899 = vadd.f32 %v897, %v898
        %v900 = vadd.f32 %v721, %v722
        %v901 = vrot.slane %v900, 4
        %v902 = vadd.f32 %v900, %v901
        %v903 = vrot.slane %v902, 2
        %v904 = vadd.f32 %v902, %v903
        %v905 = vrot.slane %v904, 1
        %v906 = vadd.f32 %v904, %v905
        %v907 = vadd.f32 %v723, %v724
        %v908 = vrot.slane %v907, 4
        %v909 = vadd.f32 %v907, %v908
        %v910 = vrot.slane %v909, 2
        %v911 = vadd.f32 %v909, %v910
        %v912 = vrot.slane %v911, 1
        %v913 = vadd.f32 %v911, %v912
        %v914 = vadd.f32 %v725, %v726
        %v915 = vrot.slane %v914, 4
        %v916 = vadd.f32 %v914, %v915
        %v917 = vrot.slane %v916, 2
        %v918 = vadd.f32 %v916, %v917
        %v919 = vrot.slane %v918, 1
        %v920 = vadd.f32 %v918, %v919
        %v921 = vadd.f32 %v727, %v728
        %v922 = vrot.slane %v921, 4
        %v923 = vadd.f32 %v921, %v922
        %v924 = vrot.slane %v923, 2
        %v925 = vadd.f32 %v923, %v924
        %v926 = vrot.slane %v925, 1
        %v927 = vadd.f32 %v925, %v926
        %v928 = vadd.f32 %v729, %v730
        %v929 = vrot.slane %v928, 4
        %v930 = vadd.f32 %v928, %v929
        %v931 = vrot.slane %v930, 2
        %v932 = vadd.f32 %v930, %v931
        %v933 = vrot.slane %v932, 1
        %v934 = vadd.f32 %v932, %v933
        %v935 = vadd.f32 %v731, %v732
        %v936 = vrot.slane %v935, 4
        %v937 = vadd.f32 %v935, %v936
        %v938 = vrot.slane %v937, 2
        %v939 = vadd.f32 %v937, %v938
        %v940 = vrot.slane %v939, 1
        %v941 = vadd.f32 %v939, %v940
        %v942 = vadd.f32 %v733, %v734
        %v943 = vrot.slane %v942, 4
        %v944 = vadd.f32 %v942, %v943
        %v945 = vrot.slane %v944, 2
        %v946 = vadd.f32 %v944, %v945
        %v947 = vrot.slane %v946, 1
        %v948 = vadd.f32 %v946, %v947
        %v949 = vadd.f32 %v735, %v736
        %v950 = vrot.slane %v949, 4
        %v951 = vadd.f32 %v949, %v950
        %v952 = vrot.slane %v951, 2
        %v953 = vadd.f32 %v951, %v952
        %v954 = vrot.slane %v953, 1
        %v955 = vadd.f32 %v953, %v954
        %v956 = vadd.f32 %v737, %v738
        %v957 = vrot.slane %v956, 4
        %v958 = vadd.f32 %v956, %v957
        %v959 = vrot.slane %v958, 2
        %v960 = vadd.f32 %v958, %v959
        %v961 = vrot.slane %v960, 1
        %v962 = vadd.f32 %v960, %v961
        %v963 = vld [vmem:[#allocation7] sm:$0xff]
        %v964 = vld [vmem:[#allocation7 + $0x8] sm:$0xff]
        %v965 = vld [vmem:[#allocation7 + $0x10] sm:$0xff]
        %v966 = vld [vmem:[#allocation7 + $0x18] sm:$0xff]
        %v967 = vld [vmem:[#allocation7 + $0x20] sm:$0xff]
        %v968 = vld [vmem:[#allocation7 + $0x28] sm:$0xff]
        %v969 = vld [vmem:[#allocation7 + $0x30] sm:$0xff]
        %v970 = vld [vmem:[#allocation7 + $0x38] sm:$0xff]
        %v971 = vld [vmem:[#allocation7 + $0x40] sm:$0xff]
        %v972 = vld [vmem:[#allocation7 + $0x48] sm:$0xff]
        %v973 = vld [vmem:[#allocation7 + $0x50] sm:$0xff]
        %v974 = vld [vmem:[#allocation7 + $0x58] sm:$0xff]
        %v975 = vld [vmem:[#allocation7 + $0x60] sm:$0xff]
        %v976 = vld [vmem:[#allocation7 + $0x68] sm:$0xff]
        %v977 = vld [vmem:[#allocation7 + $0x70] sm:$0xff]
        %v978 = vld [vmem:[#allocation7 + $0x78] sm:$0xff]
        %vm1011 = vcmask 1041409
        %v1012 = vsel %vm1011, %v752, %v745
        %vm1013 = vcmask 1042434
        %v1014 = vsel %vm1013, %v759, %v1012
        %vm1015 = vcmask 1043459
        %v1016 = vsel %vm1015, %v766, %v1014
        %vm1017 = vcmask 1044484
        %v1018 = vsel %vm1017, %v773, %v1016
        %vm1019 = vcmask 1045509
        %v1020 = vsel %vm1019, %v780, %v1018
        %vm1021 = vcmask 1046534
        %v1022 = vsel %vm1021, %v787, %v1020
        %vm1023 = vcmask 1047559
        %v1024 = vsel %vm1023, %v794, %v1022
        %v1025 = vsel %vm1011, %v808, %v801
        %v1026 = vsel %vm1013, %v815, %v1025
        %v1027 = vsel %vm1015, %v822, %v1026
        %v1028 = vsel %vm1017, %v829, %v1027
        %v1029 = vsel %vm1019, %v836, %v1028
        %v1030 = vsel %vm1021, %v843, %v1029
        %v1031 = vsel %vm1023, %v850, %v1030
        %v1032 = vsel %vm1011, %v864, %v857
        %v1033 = vsel %vm1013, %v871, %v1032
        %v1034 = vsel %vm1015, %v878, %v1033
        %v1035 = vsel %vm1017, %v885, %v1034
        %v1036 = vsel %vm1019, %v892, %v1035
        %v1037 = vsel %vm1021, %v899, %v1036
        %v1038 = vsel %vm1023, %v906, %v1037
        %v1039 = vsel %vm1011, %v920, %v913
        %v1040 = vsel %vm1013, %v927, %v1039
        %v1041 = vsel %vm1015, %v934, %v1040
        %v1042 = vsel %vm1017, %v941, %v1041
        %v1043 = vsel %vm1019, %v948, %v1042
        %v1044 = vsel %vm1021, %v955, %v1043
        %v1045 = vsel %vm1023, %v962, %v1044
        %1050 = vmatprep.subr.mxu0 0.0
        %1051 = vmatpush1.msra.mxu0 %v978
        %1052 = vmatprep.subr.mxu0 0.0
        %1053 = vmatpush1.msra.mxu0 %v977
        %1054 = vmatprep.subr.mxu0 0.0
        %1055 = vmatpush1.msra.mxu0 %v976
        %1056 = vmatprep.subr.mxu0 0.0
        %1057 = vmatpush1.msra.mxu0 %v975
        %1058 = vmatprep.subr.mxu0 0.0
        %1059 = vmatpush1.msra.mxu0 %v974
        %1060 = vmatprep.subr.mxu0 0.0
        %1061 = vmatpush1.msra.mxu0 %v973
        %1062 = vmatprep.subr.mxu0 0.0
        %1063 = vmatpush1.msra.mxu0 %v972
        %1064 = vmatprep.subr.mxu0 0.0
        %1065 = vmatpush1.msra.mxu0 %v971
        %1066 = vmatprep.subr.mxu0 0.0
        %1067 = vmatpush1.msra.mxu0 %v970
        %1068 = vmatprep.subr.mxu0 0.0
        %1069 = vmatpush1.msra.mxu0 %v969
        %1070 = vmatprep.subr.mxu0 0.0
        %1071 = vmatpush1.msra.mxu0 %v968
        %1072 = vmatprep.subr.mxu0 0.0
        %1073 = vmatpush1.msra.mxu0 %v967
        %1074 = vmatprep.subr.mxu0 0.0
        %1075 = vmatpush1.msra.mxu0 %v966
        %1076 = vmatprep.subr.mxu0 0.0
        %1077 = vmatpush1.msra.mxu0 %v965
        %1078 = vmatprep.subr.mxu0 0.0
        %1079 = vmatpush1.msra.mxu0 %v964
        %1080 = vmatprep.subr.mxu0 0.0
        %1081 = vmatpush1.msra.mxu0 %v963
        %1082 = vmatprep.subr.mxu0 0.0
        %1083 = vmatpush2.msra.mxu0 0.0
        %1084 = vmatprep.subr.mxu0 0.0
        %1085 = vmatpush2.msra.mxu0 0.0
        %1086 = vmatprep.subr.mxu0 0.0
        %1087 = vmatpush2.msra.mxu0 0.0
        %1088 = vmatprep.subr.mxu0 0.0
        %1089 = vmatpush2.msra.mxu0 0.0
        %1090 = vmatprep.subr.mxu0 0.0
        %1091 = vmatpush2.msra.mxu0 0.0
        %1092 = vmatprep.subr.mxu0 0.0
        %1093 = vmatpush2.msra.mxu0 0.0
        %1094 = vmatprep.subr.mxu0 0.0
        %1095 = vmatpush2.msra.mxu0 0.0
        %1096 = vmatprep.subr.mxu0 0.0
        %1097 = vmatpush2.msra.mxu0 0.0
        %1098 = vmatprep.subr.mxu0 0.0
        %1099 = vmatpush2.msra.mxu0 0.0
        %1100 = vmatprep.subr.mxu0 0.0
        %1101 = vmatpush2.msra.mxu0 0.0
        %1102 = vmatprep.subr.mxu0 0.0
        %1103 = vmatpush2.msra.mxu0 0.0
        %1104 = vmatprep.subr.mxu0 0.0
        %1105 = vmatpush2.msra.mxu0 0.0
        %1106 = vmatprep.subr.mxu0 0.0
        %1107 = vmatpush2.msra.mxu0 0.0
        %1108 = vmatprep.subr.mxu0 0.0
        %1109 = vmatpush2.msra.mxu0 0.0
        %1110 = vmatprep.subr.mxu0 0.0
        %1111 = vmatpush2.msra.mxu0 0.0
        %1112 = vmatprep.subr.mxu0 0.0
        %1113 = vmatpush2.msra.mxu0 0.0
        %1114 = vmatprep.mubr.f32.mxu0 0.0
        %1115 = vmatmul.mubr.f32.gmra.mxu0 %v1024
        %v1116 = vpop.f32.mrf.mxu0
        %v1117 = vadd.f32 0.0, %v1116
        %v1118 = vpop.f32.mrf.mxu0
        %1119 = vmatprep.mubr.f32.mxu0 0.0
        %1120 = vmatmul.mubr.f32.gmra.mxu0 %v1031
        %v1121 = vpop.f32.mrf.mxu0
        %v1122 = vadd.f32 0.0, %v1121
        %v1123 = vpop.f32.mrf.mxu0
        %1124 = vmatprep.mubr.f32.mxu0 0.0
        %1125 = vmatmul.mubr.f32.gmra.mxu0 %v1038
        %v1126 = vpop.f32.mrf.mxu0
        %v1127 = vadd.f32 0.0, %v1126
        %v1128 = vpop.f32.mrf.mxu0
        %1129 = vmatprep.mubr.f32.mxu0 0.0
        %1130 = vmatmul.mubr.f32.gmra.mxu0 %v1045
        %v1131 = vpop.f32.mrf.mxu0
        %v1132 = vadd.f32 0.0, %v1131
        %v1133 = vpop.f32.mrf.mxu0
        %1134 = vdwg.mxu0
        %v1135 = vld [vmem:[%s5] sm:$0xff]
        %v1136 = vld [vmem:[%s5 + $0x8] sm:$0xff]
        %v1137 = vld [vmem:[%s6] sm:$0xff]
        %v1138 = vld [vmem:[%s6 + $0x8] sm:$0xff]
        %vm1139 = vcmask 130048
        %v1141 = vsel %vm1139, %v1135, 0
        %v1144 = vsel %vm1139, %v1136, 0
        %1146 = vmatprep.subr.mxu0 0.0
        %1147 = vmatpush1.msra.mxu0 0.0
        %1148 = vmatprep.subr.mxu0 0.0
        %1149 = vmatpush1.msra.mxu0 0.0
        %1150 = vmatprep.subr.mxu0 0.0
        %1151 = vmatpush1.msra.mxu0 0.0
        %1152 = vmatprep.subr.mxu0 0.0
        %1153 = vmatpush1.msra.mxu0 0.0
        %1154 = vmatprep.subr.mxu0 0.0
        %1155 = vmatpush1.msra.mxu0 0.0
        %1156 = vmatprep.subr.mxu0 0.0
        %1157 = vmatpush1.msra.mxu0 0.0
        %1158 = vmatprep.subr.mxu0 0.0
        %1159 = vmatpush1.msra.mxu0 0.0
        %1160 = vmatprep.subr.mxu0 0.0
        %1161 = vmatpush1.msra.mxu0 0.0
        %1162 = vmatprep.subr.mxu0 0.0
        %1163 = vmatpush1.msra.mxu0 0.0
        %1164 = vmatprep.subr.mxu0 0.0
        %1165 = vmatpush1.msra.mxu0 0.0
        %1166 = vmatprep.subr.mxu0 0.0
        %1167 = vmatpush1.msra.mxu0 0.0
        %1168 = vmatprep.subr.mxu0 0.0
        %1169 = vmatpush1.msra.mxu0 0.0
        %1170 = vmatprep.subr.mxu0 0.0
        %1171 = vmatpush1.msra.mxu0 0.0
        %1172 = vmatprep.subr.mxu0 0.0
        %1173 = vmatpush1.msra.mxu0 0.0
        %1174 = vmatprep.subr.mxu0 0.0
        %1175 = vmatpush1.msra.mxu0 %v359
        %1176 = vmatprep.subr.mxu0 0.0
        %1177 = vmatpush1.msra.mxu0 %v358
        %1178 = vmatprep.subr.mxu0 0.0
        %1179 = vmatpush2.msra.mxu0 0.0
        %1180 = vmatprep.subr.mxu0 0.0
        %1181 = vmatpush2.msra.mxu0 0.0
        %1182 = vmatprep.subr.mxu0 0.0
        %1183 = vmatpush2.msra.mxu0 0.0
        %1184 = vmatprep.subr.mxu0 0.0
        %1185 = vmatpush2.msra.mxu0 0.0
        %1186 = vmatprep.subr.mxu0 0.0
        %1187 = vmatpush2.msra.mxu0 0.0
        %1188 = vmatprep.subr.mxu0 0.0
        %1189 = vmatpush2.msra.mxu0 0.0
        %1190 = vmatprep.subr.mxu0 0.0
        %1191 = vmatpush2.msra.mxu0 0.0
        %1192 = vmatprep.subr.mxu0 0.0
        %1193 = vmatpush2.msra.mxu0 0.0
        %1194 = vmatprep.subr.mxu0 0.0
        %1195 = vmatpush2.msra.mxu0 0.0
        %1196 = vmatprep.subr.mxu0 0.0
        %1197 = vmatpush2.msra.mxu0 0.0
        %1198 = vmatprep.subr.mxu0 0.0
        %1199 = vmatpush2.msra.mxu0 0.0
        %1200 = vmatprep.subr.mxu0 0.0
        %1201 = vmatpush2.msra.mxu0 0.0
        %1202 = vmatprep.subr.mxu0 0.0
        %1203 = vmatpush2.msra.mxu0 0.0
        %1204 = vmatprep.subr.mxu0 0.0
        %1205 = vmatpush2.msra.mxu0 0.0
        %1206 = vmatprep.subr.mxu0 0.0
        %1207 = vmatpush2.msra.mxu0 0.0
        %1208 = vmatprep.subr.mxu0 0.0
        %1209 = vmatpush2.msra.mxu0 0.0
        %1210 = vmatprep.mubr.f32.mxu0 0.0
        %1211 = vmatmul.mubr.f32.gmra.mxu0 %v1141
        %v1212 = vpop.f32.mrf.mxu0
        %v1213 = vadd.f32 0.0, %v1212
        %v1214 = vpop.f32.mrf.mxu0
        %1215 = vmatprep.mubr.f32.mxu0 0.0
        %1216 = vmatmul.mubr.f32.gmra.mxu0 %v1144
        %v1217 = vpop.f32.mrf.mxu0
        %v1218 = vadd.f32 0.0, %v1217
        %v1219 = vpop.f32.mrf.mxu0
        %1220 = vdwg.mxu0
        %v1221 = vadd.f32 %v1117, %v1213
        %v1222 = vadd.f32 %v1122, %v1218
        %1224 = vset.pattern.permute.xlu0 0
        %1225 = vperm.xlu0 %1224, %v1137
        %v1226 = vpop.permute.xlu0 %1225
        %1229 = vset.pattern.permute.xlu0 0
        %1230 = vperm.xlu0 %1229, %v1138
        %v1231 = vpop.permute.xlu0 %1230
        %v1233 = vadd.f32 %v1221, %v1226
        %v1234 = vadd.f32 %v1222, %v1231
        %v1235 = vmax.f32 %v1233, 0.0
        %v1236 = vmax.f32 %v1234, 0.0
        %1237 = vst [vmem:[%s355] sm:$0xff] %v1235
        %1238 = vst [vmem:[%s355 + $0x8] sm:$0xff] %v1236
        %1239 = vmatprep.subr.mxu0 0.0
        %1240 = vmatpush1.msra.mxu0 0.0
        %1241 = vmatprep.subr.mxu0 0.0
        %1242 = vmatpush1.msra.mxu0 0.0
        %1243 = vmatprep.subr.mxu0 0.0
        %1244 = vmatpush1.msra.mxu0 0.0
        %1245 = vmatprep.subr.mxu0 0.0
        %1246 = vmatpush1.msra.mxu0 0.0
        %1247 = vmatprep.subr.mxu0 0.0
        %1248 = vmatpush1.msra.mxu0 0.0
        %1249 = vmatprep.subr.mxu0 0.0
        %1250 = vmatpush1.msra.mxu0 0.0
        %1251 = vmatprep.subr.mxu0 0.0
        %1252 = vmatpush1.msra.mxu0 0.0
        %1253 = vmatprep.subr.mxu0 0.0
        %1254 = vmatpush1.msra.mxu0 0.0
        %1255 = vmatprep.subr.mxu0 0.0
        %1256 = vmatpush1.msra.mxu0 0.0
        %1257 = vmatprep.subr.mxu0 0.0
        %1258 = vmatpush1.msra.mxu0 0.0
        %1259 = vmatprep.subr.mxu0 0.0
        %1260 = vmatpush1.msra.mxu0 0.0
        %1261 = vmatprep.subr.mxu0 0.0
        %1262 = vmatpush1.msra.mxu0 0.0
        %1263 = vmatprep.subr.mxu0 0.0
        %1264 = vmatpush1.msra.mxu0 0.0
        %1265 = vmatprep.subr.mxu0 0.0
        %1266 = vmatpush1.msra.mxu0 0.0
        %1267 = vmatprep.subr.mxu0 0.0
        %1268 = vmatpush1.msra.mxu0 %v361
        %1269 = vmatprep.subr.mxu0 0.0
        %1270 = vmatpush1.msra.mxu0 %v360
        %1271 = vmatprep.subr.mxu0 0.0
        %1272 = vmatpush2.msra.mxu0 0.0
        %1273 = vmatprep.subr.mxu0 0.0
        %1274 = vmatpush2.msra.mxu0 0.0
        %1275 = vmatprep.subr.mxu0 0.0
        %1276 = vmatpush2.msra.mxu0 0.0
        %1277 = vmatprep.subr.mxu0 0.0
        %1278 = vmatpush2.msra.mxu0 0.0
        %1279 = vmatprep.subr.mxu0 0.0
        %1280 = vmatpush2.msra.mxu0 0.0
        %1281 = vmatprep.subr.mxu0 0.0
        %1282 = vmatpush2.msra.mxu0 0.0
        %1283 = vmatprep.subr.mxu0 0.0
        %1284 = vmatpush2.msra.mxu0 0.0
        %1285 = vmatprep.subr.mxu0 0.0
        %1286 = vmatpush2.msra.mxu0 0.0
        %1287 = vmatprep.subr.mxu0 0.0
        %1288 = vmatpush2.msra.mxu0 0.0
        %1289 = vmatprep.subr.mxu0 0.0
        %1290 = vmatpush2.msra.mxu0 0.0
        %1291 = vmatprep.subr.mxu0 0.0
        %1292 = vmatpush2.msra.mxu0 0.0
        %1293 = vmatprep.subr.mxu0 0.0
        %1294 = vmatpush2.msra.mxu0 0.0
        %1295 = vmatprep.subr.mxu0 0.0
        %1296 = vmatpush2.msra.mxu0 0.0
        %1297 = vmatprep.subr.mxu0 0.0
        %1298 = vmatpush2.msra.mxu0 0.0
        %1299 = vmatprep.subr.mxu0 0.0
        %1300 = vmatpush2.msra.mxu0 0.0
        %1301 = vmatprep.subr.mxu0 0.0
        %1302 = vmatpush2.msra.mxu0 0.0
        %1303 = vmatprep.mubr.f32.mxu0 0.0
        %1304 = vmatmul.mubr.f32.gmra.mxu0 %v1141
        %v1305 = vpop.f32.mrf.mxu0
        %v1306 = vadd.f32 0.0, %v1305
        %v1307 = vpop.f32.mrf.mxu0
        %1308 = vmatprep.mubr.f32.mxu0 0.0
        %1309 = vmatmul.mubr.f32.gmra.mxu0 %v1144
        %v1310 = vpop.f32.mrf.mxu0
        %v1311 = vadd.f32 0.0, %v1310
        %v1312 = vpop.f32.mrf.mxu0
        %1313 = vdwg.mxu0
        %v1314 = vadd.f32 %v1127, %v1306
        %v1315 = vadd.f32 %v1132, %v1311
        %v1316 = vadd.f32 %v1314, %v1226
        %v1317 = vadd.f32 %v1315, %v1231
        %v1318 = vmax.f32 %v1316, 0.0
        %v1319 = vmax.f32 %v1317, 0.0
        %s1320 = scalar_lea.vmem %s355, 16 [#allocation11]
        %1321 = vst [vmem:[%s1320] sm:$0xff] %v1318
        %1322 = vst [vmem:[%s1320 + $0x8] sm:$0xff] %v1319
        %s1323 = sand.u32 %s186, 1
        %s1324 = scalar_lea.sflag [#allocation4], %s1323
        %s1325 = sand.u32 %s186, 1
        %s1326 = smul.addr %s1325, 32
        %s1327 = scalar_lea.vmem [#allocation11], %s1326
        // Predicated region
        $region69: #{tpu_custom_call.1} parent=47 // pred_check
          %p1328 = pneg %p196
        $region70: #{tpu_custom_call.1} parent=47 // pred_check_branch
          %1330 = sbr.rel (%p1328) target = $region72
        $region71: #{tpu_custom_call.1} parent=47 // pred_region
          %s1331 = smul.u32 2, %s26
          %s1333 = ssub.s32 512, 512
          %1334 = vsyncadd %s1324, %s1333
          %s1335 = smul.addr %s1331, 2
          %s1336 = smul.addr %s1335, 128
          %s1337 = scalar_lea.hbm %s7, %s1336
          %s1338 = sshll.u32 %s1327, 4
          %s1339 = int_to_ptr.vmem [resolvable:$true] %s1338
          %1344 = dma.vmem_to_hbm [thread:$0]  %s1339, 512, %s1337, %s1324, 128, 128, 8
        $region72: #{tpu_custom_call.1} parent=47 // pred_fallthru
          _
      $region48: #{tpu_custom_call.1} parent=5 // pred_fallthru
        _
      %p1345 = scmp.le.s32.totalorder 2, %s21
      // Predicated region
      $region73: #{tpu_custom_call.1} parent=5 // pred_check
        %p1346 = pneg %p1345
      $region74: #{tpu_custom_call.1} parent=5 // pred_check_branch
        %1348 = sbr.rel (%p1346) target = $region76
      $region75: #{tpu_custom_call.1} parent=5 // pred_region
        %s1349 = ssub.s32 %s21, 2
        // Predicated region
        $region77: #{tpu_custom_call.1} parent=75 // pred_check
          %p1350 = pneg %p202
        $region78: #{tpu_custom_call.1} parent=75 // pred_check_branch
          %1352 = sbr.rel (%p1350) target = $region80
        $region79: #{tpu_custom_call.1} parent=75 // pred_region
          %s1353 = sand.u32 %s187, 1
          %s1354 = scalar_lea.sflag [#allocation4], %s1353
          %s1355 = sand.u32 %s187, 1
          %s1356 = smul.addr %s1355, 32
          %s1357 = scalar_lea.vmem [#allocation11], %s1356
          %1358 = dma.done %s1354, 512
        $region80: #{tpu_custom_call.1} parent=75 // pred_fallthru
          _
      $region76: #{tpu_custom_call.1} parent=5 // pred_fallthru
        _
    $region6: #{tpu_custom_call.1} parent=1 // loop_footer
      %s25 = sadd.s32 1, %s21
    $region7: #{tpu_custom_call.1} parent=1 // loop_footer_branch
      %20 = sbr.rel target = $region3
    $region8: #{tpu_custom_call.1} parent=1 // loop_exit
      _
    %1359 = vsyncpa [#allocation3], 1
    %s1360 = scalar_lea.sflag [#allocation3], 1
    %1361 = vsyncpa %s1360, 1
    %1362 = vsyncpa [#allocation6], 1
    %1363 = vsyncpa [#allocation9], 1
    %1364 = vsyncpa [#allocation4], 1
    %s1365 = scalar_lea.sflag [#allocation4], 1
    %1366 = vsyncpa %s1365, 1

</llo_original>
